<compile_context>
chip_gen: v5e
topology: v5e:2x2
jax: 0.10.0
libtpu: 0.0.40
codegen_flags: <defaults>
</compile_context>

<pallas_src>
import math
import jax
import jax.numpy as jnp
from jax import lax
from jax.experimental import pallas as pl
from jax.experimental.pallas import tpu as pltpu

# ---- config (small, consistent with the BertConfig fields used) ----
B = 2            # batch
S = 8            # sequence length
H = 32           # hidden_size
NH = 4           # num_attention_heads
DH = H // NH     # attention_head_size
IH = 64          # intermediate_size
NLAYERS = 2      # num_hidden_layers
EPS = 1e-12

_ATTN_SCALE = 1.0 / math.sqrt(DH)
_INV_SQRT2 = 1.0 / math.sqrt(2.0)


def _layernorm(x, g, b):
    # TF-style BertLayerNorm (epsilon inside the sqrt).  g/b are already
    # broadcast to x.shape (hoisted outside the layer loop).
    u = jnp.mean(x, axis=-1, keepdims=True)
    xc = x - u
    s = jnp.mean(xc * xc, axis=-1, keepdims=True)
    return g * (xc * lax.rsqrt(s + EPS)) + b


def _make_kernel(store_all):
    def bert_encoder_kernel(x_ref, mask_ref, wqkv_ref, bqkv_ref, wo_ref,
                            wi_ref, w2_ref, pvec_ref, out_ref):
        # Per grid step: one batch row.
        # x_ref    : (1, S, H)
        # mask_ref : (1, 1, S)   additive attention mask for this batch row
        # wqkv_ref : (NH, H, 3*DH)  head-major fused Q/K/V weights
        # bqkv_ref : (NH, 1, 3*DH)  head-major fused Q/K/V bias
        # wo_ref   : (NH, DH, H)    head-major output projection
        # wi_ref   : (H, IH), w2_ref: (IH, H)
        # pvec_ref : (8, IH) packed small vectors (bo,g1,be1,b2,g2,be2,bi)
        h = x_ref[0]                                    # (S, H)

        # ---- hoisted loop-invariant loads & broadcasts (done once) ----
        wqkv = wqkv_ref[...]
        wo = wo_ref[...]
        wi = wi_ref[...]
        w2 = w2_ref[...]
        pv = pvec_ref[...]
        bqkv = jnp.broadcast_to(bqkv_ref[...], (NH, S, 3 * DH))
        bo = jnp.broadcast_to(pv[0:1, :H], (S, H))
        g1 = jnp.broadcast_to(pv[1:2, :H], (S, H))
        be1 = jnp.broadcast_to(pv[2:3, :H], (S, H))
        b2 = jnp.broadcast_to(pv[3:4, :H], (S, H))
        g2 = jnp.broadcast_to(pv[4:5, :H], (S, H))
        be2 = jnp.broadcast_to(pv[5:6, :H], (S, H))
        bi = jnp.broadcast_to(pv[6:7, :], (S, IH))
        maskb = jnp.broadcast_to(mask_ref[...], (NH, S, S))

        for layer in range(NLAYERS):        # layers share (deepcopied) weights
            # --- BertSelfAttention: head-major fused QKV projection ---
            hb = jnp.broadcast_to(h[None], (NH, S, H))
            qkv = jnp.einsum('hsd,hde->hse', hb, wqkv,
                             preferred_element_type=jnp.float32) + bqkv
            q = qkv[:, :, :DH]
            k = qkv[:, :, DH:2 * DH]
            v = qkv[:, :, 2 * DH:]

            scores = jnp.einsum('hqd,hkd->hqk', q, k,
                                preferred_element_type=jnp.float32)
            scores = scores * _ATTN_SCALE + maskb
            scores = scores - jnp.max(scores, axis=-1, keepdims=True)
            e = jnp.exp(scores)
            probs = e / jnp.sum(e, axis=-1, keepdims=True)   # exact softmax
            # dropout(attention_probs) is identity at inference
            ctx = jnp.einsum('hqk,hkd->hqd', probs, v,
                             preferred_element_type=jnp.float32)  # (NH,S,DH)

            # --- BertSelfOutput: dense + residual + LayerNorm ---
            # sum over heads of ctx_h @ Wo_h  ==  concat(heads) @ Wo
            attn = jnp.sum(
                jnp.einsum('hqd,hdo->hqo', ctx, wo,
                           preferred_element_type=jnp.float32), axis=0) + bo
            h1 = _layernorm(attn + h, g1, be1)

            # --- BertIntermediate: dense + gelu (exact erf form) ---
            inter = jnp.dot(h1, wi, preferred_element_type=jnp.float32) + bi
            inter = inter * 0.5 * (1.0 + lax.erf(inter * _INV_SQRT2))

            # --- BertOutput: dense + residual + LayerNorm ---
            ffn = jnp.dot(inter, w2, preferred_element_type=jnp.float32) + b2
            h = _layernorm(ffn + h1, g2, be2)

            if store_all:
                out_ref[layer, 0] = h

        if not store_all:
            out_ref[0] = h

    return bert_encoder_kernel


def bert_encoder(hidden_states, attention_mask, params,
                 output_all_encoded_layers=False):
    """Full BertEncoder forward: one pallas_call, grid over the batch."""
    wqkv_hm, bqkv_hm, wo_hm, wi, w2, pvec = params
    mask = attention_mask.reshape(B, 1, S)
    store_all = bool(output_all_encoded_layers)

    in_specs = [
        pl.BlockSpec((1, S, H), lambda b: (b, 0, 0)),            # x
        pl.BlockSpec((1, 1, S), lambda b: (b, 0, 0)),            # mask
        pl.BlockSpec((NH, H, 3 * DH), lambda b: (0, 0, 0)),      # wqkv (head-major)
        pl.BlockSpec((NH, 1, 3 * DH), lambda b: (0, 0, 0)),      # bqkv (head-major)
        pl.BlockSpec((NH, DH, H), lambda b: (0, 0, 0)),          # wo (head-major)
        pl.BlockSpec((H, IH), lambda b: (0, 0)),                 # wi
        pl.BlockSpec((IH, H), lambda b: (0, 0)),                 # w2
        pl.BlockSpec((8, IH), lambda b: (0, 0)),                 # packed vectors
    ]

    if store_all:
        out_shape = jax.ShapeDtypeStruct((NLAYERS, B, S, H), jnp.float32)
        out_spec = pl.BlockSpec((NLAYERS, 1, S, H), lambda b: (0, b, 0, 0))
    else:
        # only materialize the consumed (final) layer output
        out_shape = jax.ShapeDtypeStruct((B, S, H), jnp.float32)
        out_spec = pl.BlockSpec((1, S, H), lambda b: (b, 0, 0))

    out = pl.pallas_call(
        _make_kernel(store_all),
        out_shape=out_shape,
        grid=(B,),
        in_specs=in_specs,
        out_specs=out_spec,
        compiler_params=pltpu.CompilerParams(
            dimension_semantics=("parallel",)),
    )(hidden_states, mask, wqkv_hm, bqkv_hm, wo_hm, wi, w2, pvec)

    if store_all:
        return [out[l] for l in range(NLAYERS)]
    return [out]


def init_encoder_params(key):
    """One BertLayer's parameters (shared by all layers, matching deepcopy
    init).  Linear weights are stored pre-transposed as (in, out); Q/K/V and
    the output projection are re-packed head-major; all small vectors are
    packed into one (8, IH) slab."""
    keys = jax.random.split(key, 6)
    std = 0.02

    def lin(k, din, dout):
        w = std * jax.random.normal(k, (din, dout), jnp.float32)
        b = jnp.zeros((dout,), jnp.float32)
        return w, b

    wq, bq = lin(keys[0], H, H)
    wk, bk = lin(keys[1], H, H)
    wv, bv = lin(keys[2], H, H)
    wo, bo = lin(keys[3], H, H)
    wi, bi = lin(keys[4], H, IH)
    w2, b2 = lin(keys[5], IH, H)
    g1 = jnp.ones((H,), jnp.float32); be1 = jnp.zeros((H,), jnp.float32)
    g2 = jnp.ones((H,), jnp.float32); be2 = jnp.zeros((H,), jnp.float32)

    # head-major fused QKV weights / bias:  (NH, H, 3*DH) / (NH, 1, 3*DH)
    wqkv_hm = jnp.stack([
        jnp.concatenate([wq[:, i * DH:(i + 1) * DH],
                         wk[:, i * DH:(i + 1) * DH],
                         wv[:, i * DH:(i + 1) * DH]], axis=1)
        for i in range(NH)], axis=0)
    bqkv_hm = jnp.stack([
        jnp.concatenate([bq[i * DH:(i + 1) * DH],
                         bk[i * DH:(i + 1) * DH],
                         bv[i * DH:(i + 1) * DH]])[None, :]
        for i in range(NH)], axis=0)
    # head-major output projection: (NH, DH, H)
    wo_hm = jnp.stack([wo[i * DH:(i + 1) * DH, :] for i in range(NH)], axis=0)

    # pack all small vectors into one slab (single DMA / single VMEM tile)
    pvec = jnp.zeros((8, IH), jnp.float32)
    pvec = pvec.at[0, :H].set(bo)
    pvec = pvec.at[1, :H].set(g1)
    pvec = pvec.at[2, :H].set(be1)
    pvec = pvec.at[3, :H].set(b2)
    pvec = pvec.at[4, :H].set(g2)
    pvec = pvec.at[5, :H].set(be2)
    pvec = pvec.at[6, :].set(bi)
    return [wqkv_hm, bqkv_hm, wo_hm, wi, w2, pvec]


def _ref_encoder(x, mask, params):
    """Pure-JAX reference (same math) for a correctness check."""
    wqkv_hm, bqkv_hm, wo_hm, wi, w2, pvec = params
    bo, g1, be1 = pvec[0, :H], pvec[1, :H], pvec[2, :H]
    b2, g2, be2 = pvec[3, :H], pvec[4, :H], pvec[5, :H]
    bi = pvec[6, :]
    hp = lax.Precision.HIGHEST

    def ln(v, g, b):
        u = v.mean(-1, keepdims=True)
        s = ((v - u) ** 2).mean(-1, keepdims=True)
        return g * ((v - u) * lax.rsqrt(s + EPS)) + b

    m4 = mask.reshape(B, 1, 1, S)
    h = x
    for _ in range(NLAYERS):
        qkv = jnp.einsum('bsd,hde->bhse', h, wqkv_hm, precision=hp) + bqkv_hm[None]
        q, k, v = qkv[..., :DH], qkv[..., DH:2 * DH], qkv[..., 2 * DH:]
        sc = jnp.einsum('bhqd,bhkd->bhqk', q, k, precision=hp) * _ATTN_SCALE + m4
        sc = sc - sc.max(-1, keepdims=True)
        e = jnp.exp(sc)
        p = e / e.sum(-1, keepdims=True)
        ctx = jnp.einsum('bhqk,bhkd->bhqd', p, v, precision=hp)
        attn = jnp.einsum('bhqd,hdo->bqo', ctx, wo_hm, precision=hp) + bo
        h1 = ln(attn + h, g1, be1)
        it = jnp.einsum('bsd,de->bse', h1, wi, precision=hp) + bi
        it = it * 0.5 * (1.0 + lax.erf(it * _INV_SQRT2))
        ffn = jnp.einsum('bse,eo->bso', it, w2, precision=hp) + b2
        h = ln(ffn + h1, g2, be2)
    return h


if __name__ == "__main__":
    key = jax.random.PRNGKey(0)
    k_x, k_p = jax.random.split(key)

    # input hidden states [B, S, H]
    x = jax.random.normal(k_x, (B, S, H), jnp.float32)

    # standard BERT additive attention mask: (1 - valid) * -10000, shape [B, 1, S]
    valid = jnp.ones((B, S), jnp.float32)
    valid = valid.at[1, -2:].set(0.0)               # mask last 2 tokens of batch 1
    attn_mask = ((1.0 - valid) * -10000.0).reshape(B, 1, S)

    params = init_encoder_params(k_p)

    outs = bert_encoder(x, attn_mask, params, output_all_encoded_layers=False)
    final = jax.block_until_ready(outs[-1])
    assert final.shape == (B, S, H)
    assert bool(jnp.all(jnp.isfinite(final)))

    # numerical parity vs pure-JAX reference
    ref = jax.block_until_ready(_ref_encoder(x, attn_mask, params))
    assert bool(jnp.allclose(final, ref, rtol=2e-3, atol=2e-3))

    print("KERNEL_OK")
</pallas_src>

<mosaic_0001>
module attributes {stable_mosaic.version = 11 : i64} {
  func.func @bert_encoder_kernel(%arg0: i32, %arg1: memref<1x8x32xf32, #tpu.memory_space<vmem>>, %arg2: memref<1x1x8xf32, #tpu.memory_space<vmem>>, %arg3: memref<4x32x24xf32, #tpu.memory_space<vmem>>, %arg4: memref<4x1x24xf32, #tpu.memory_space<vmem>>, %arg5: memref<4x8x32xf32, #tpu.memory_space<vmem>>, %arg6: memref<32x64xf32, #tpu.memory_space<vmem>>, %arg7: memref<64x32xf32, #tpu.memory_space<vmem>>, %arg8: memref<8x64xf32, #tpu.memory_space<vmem>>, %arg9: memref<1x8x32xf32, #tpu.memory_space<vmem>>) attributes {dimension_semantics = [#tpu.dimension_semantics<parallel>], iteration_bounds = array<i64: 2>, scalar_prefetch = 0 : i64, scratch_operands = 0 : i64, tpu.core_type = #tpu.core_type<tc>, window_params = [{transform_indices = @transform_0, window_bounds = array<i64: 1, 8, 32>}, {transform_indices = @transform_1, window_bounds = array<i64: 1, 1, 8>}, {pipeline_mode = #tpu.pipeline_mode<synchronous>, transform_indices = @transform_2, window_bounds = array<i64: 4, 32, 24>}, {pipeline_mode = #tpu.pipeline_mode<synchronous>, transform_indices = @transform_3, window_bounds = array<i64: 4, 1, 24>}, {pipeline_mode = #tpu.pipeline_mode<synchronous>, transform_indices = @transform_4, window_bounds = array<i64: 4, 8, 32>}, {pipeline_mode = #tpu.pipeline_mode<synchronous>, transform_indices = @transform_5, window_bounds = array<i64: 32, 64>}, {pipeline_mode = #tpu.pipeline_mode<synchronous>, transform_indices = @transform_6, window_bounds = array<i64: 64, 32>}, {pipeline_mode = #tpu.pipeline_mode<synchronous>, transform_indices = @transform_7, window_bounds = array<i64: 8, 64>}, {transform_indices = @transform_8, window_bounds = array<i64: 1, 8, 32>}]} {
    %c0 = arith.constant 0 : index
    %c0_0 = arith.constant 0 : index
    %c0_1 = arith.constant 0 : index
    %0 = vector.load %arg1[%c0, %c0_0, %c0_1] : memref<1x8x32xf32, #tpu.memory_space<vmem>>, vector<1x8x32xf32>
    %1 = vector.shape_cast %0 : vector<1x8x32xf32> to vector<8x32xf32>
    %c0_2 = arith.constant 0 : index
    %c0_3 = arith.constant 0 : index
    %c0_4 = arith.constant 0 : index
    %2 = vector.load %arg3[%c0_2, %c0_3, %c0_4] : memref<4x32x24xf32, #tpu.memory_space<vmem>>, vector<4x32x24xf32>
    %c0_5 = arith.constant 0 : index
    %c0_6 = arith.constant 0 : index
    %c0_7 = arith.constant 0 : index
    %3 = vector.load %arg5[%c0_5, %c0_6, %c0_7] : memref<4x8x32xf32, #tpu.memory_space<vmem>>, vector<4x8x32xf32>
    %c0_8 = arith.constant 0 : index
    %c0_9 = arith.constant 0 : index
    %4 = vector.load %arg6[%c0_8, %c0_9] : memref<32x64xf32, #tpu.memory_space<vmem>>, vector<32x64xf32>
    %c0_10 = arith.constant 0 : index
    %c0_11 = arith.constant 0 : index
    %5 = vector.load %arg7[%c0_10, %c0_11] : memref<64x32xf32, #tpu.memory_space<vmem>>, vector<64x32xf32>
    %c0_12 = arith.constant 0 : index
    %c0_13 = arith.constant 0 : index
    %6 = vector.load %arg8[%c0_12, %c0_13] : memref<8x64xf32, #tpu.memory_space<vmem>>, vector<8x64xf32>
    %c0_14 = arith.constant 0 : index
    %c0_15 = arith.constant 0 : index
    %c0_16 = arith.constant 0 : index
    %7 = vector.load %arg4[%c0_14, %c0_15, %c0_16] : memref<4x1x24xf32, #tpu.memory_space<vmem>>, vector<4x1x24xf32>
    %8 = vector.shape_cast %7 : vector<4x1x24xf32> to vector<4x1x24xf32>
    %9 = vector.broadcast %8 : vector<4x1x24xf32> to vector<4x8x24xf32>
    %10 = vector.extract_strided_slice %6 {offsets = [0, 0], sizes = [1, 32], strides = [1, 1]} : vector<8x64xf32> to vector<1x32xf32>
    %11 = vector.shape_cast %10 : vector<1x32xf32> to vector<1x32xf32>
    %12 = vector.broadcast %11 : vector<1x32xf32> to vector<8x32xf32>
    %13 = vector.extract_strided_slice %6 {offsets = [1, 0], sizes = [1, 32], strides = [1, 1]} : vector<8x64xf32> to vector<1x32xf32>
    %14 = vector.shape_cast %13 : vector<1x32xf32> to vector<1x32xf32>
    %15 = vector.broadcast %14 : vector<1x32xf32> to vector<8x32xf32>
    %16 = vector.extract_strided_slice %6 {offsets = [2, 0], sizes = [1, 32], strides = [1, 1]} : vector<8x64xf32> to vector<1x32xf32>
    %17 = vector.shape_cast %16 : vector<1x32xf32> to vector<1x32xf32>
    %18 = vector.broadcast %17 : vector<1x32xf32> to vector<8x32xf32>
    %19 = vector.extract_strided_slice %6 {offsets = [3, 0], sizes = [1, 32], strides = [1, 1]} : vector<8x64xf32> to vector<1x32xf32>
    %20 = vector.shape_cast %19 : vector<1x32xf32> to vector<1x32xf32>
    %21 = vector.broadcast %20 : vector<1x32xf32> to vector<8x32xf32>
    %22 = vector.extract_strided_slice %6 {offsets = [4, 0], sizes = [1, 32], strides = [1, 1]} : vector<8x64xf32> to vector<1x32xf32>
    %23 = vector.shape_cast %22 : vector<1x32xf32> to vector<1x32xf32>
    %24 = vector.broadcast %23 : vector<1x32xf32> to vector<8x32xf32>
    %25 = vector.extract_strided_slice %6 {offsets = [5, 0], sizes = [1, 32], strides = [1, 1]} : vector<8x64xf32> to vector<1x32xf32>
    %26 = vector.shape_cast %25 : vector<1x32xf32> to vector<1x32xf32>
    %27 = vector.broadcast %26 : vector<1x32xf32> to vector<8x32xf32>
    %28 = vector.extract_strided_slice %6 {offsets = [6, 0], sizes = [1, 64], strides = [1, 1]} : vector<8x64xf32> to vector<1x64xf32>
    %29 = vector.shape_cast %28 : vector<1x64xf32> to vector<1x64xf32>
    %30 = vector.broadcast %29 : vector<1x64xf32> to vector<8x64xf32>
    %c0_17 = arith.constant 0 : index
    %c0_18 = arith.constant 0 : index
    %c0_19 = arith.constant 0 : index
    %31 = vector.load %arg2[%c0_17, %c0_18, %c0_19] : memref<1x1x8xf32, #tpu.memory_space<vmem>>, vector<1x1x8xf32>
    %32 = vector.shape_cast %31 : vector<1x1x8xf32> to vector<1x1x8xf32>
    %33 = vector.broadcast %32 : vector<1x1x8xf32> to vector<4x8x8xf32>
    %34 = vector.shape_cast %1 : vector<8x32xf32> to vector<1x8x32xf32>
    %35 = vector.shape_cast %34 : vector<1x8x32xf32> to vector<1x8x32xf32>
    %36 = vector.broadcast %35 : vector<1x8x32xf32> to vector<4x8x32xf32>
    "tpu.trace_start"() <{level = 10 : i32, message = "hsd,hde->hse"}> : () -> ()
    %cst = arith.constant dense<0.000000e+00> : vector<4x8x24xf32>
    %37 = tpu.matmul %36, %2, %cst {dimension_numbers = #tpu.dot_dimension_numbers<[2], [1], [1], [2], [0, 0, 0, 1, 1, 2], [0], [0]>} : vector<4x8x32xf32>, vector<4x32x24xf32>, vector<4x8x24xf32> -> vector<4x8x24xf32>
    "tpu.trace_stop"() : () -> ()
    %38 = arith.addf %37, %9 : vector<4x8x24xf32>
    %39 = vector.extract_strided_slice %38 {offsets = [0, 0, 0], sizes = [4, 8, 8], strides = [1, 1, 1]} : vector<4x8x24xf32> to vector<4x8x8xf32>
    %40 = vector.extract_strided_slice %38 {offsets = [0, 0, 8], sizes = [4, 8, 8], strides = [1, 1, 1]} : vector<4x8x24xf32> to vector<4x8x8xf32>
    %41 = vector.extract_strided_slice %38 {offsets = [0, 0, 16], sizes = [4, 8, 8], strides = [1, 1, 1]} : vector<4x8x24xf32> to vector<4x8x8xf32>
    "tpu.trace_start"() <{level = 10 : i32, message = "hqd,hkd->hqk"}> : () -> ()
    %cst_20 = arith.constant dense<0.000000e+00> : vector<4x8x8xf32>
    %42 = tpu.matmul %39, %40, %cst_20 {dimension_numbers = #tpu.dot_dimension_numbers<[2], [2], [1], [1], [0, 0, 0, 1, 1, 1], [0], [0]>} : vector<4x8x8xf32>, vector<4x8x8xf32>, vector<4x8x8xf32> -> vector<4x8x8xf32>
    "tpu.trace_stop"() : () -> ()
    %cst_21 = arith.constant 0.353553385 : f32
    %43 = vector.broadcast %cst_21 : f32 to vector<4x8x8xf32>
    %44 = arith.mulf %42, %43 : vector<4x8x8xf32>
    %45 = arith.addf %44, %33 : vector<4x8x8xf32>
    %cst_22 = arith.constant dense<0xFF800000> : vector<4x8xf32>
    %46 = vector.multi_reduction <maximumf>, %45, %cst_22 [2] : vector<4x8x8xf32> to vector<4x8xf32>
    %47 = vector.shape_cast %46 : vector<4x8xf32> to vector<4x8x1xf32>
    %48 = vector.broadcast %47 : vector<4x8x1xf32> to vector<4x8x8xf32>
    %49 = arith.subf %45, %48 : vector<4x8x8xf32>
    %50 = math.exp %49 : vector<4x8x8xf32>
    %cst_23 = arith.constant dense<0.000000e+00> : vector<4x8xf32>
    %51 = vector.multi_reduction <add>, %50, %cst_23 [2] : vector<4x8x8xf32> to vector<4x8xf32>
    %52 = vector.shape_cast %51 : vector<4x8xf32> to vector<4x8x1xf32>
    %53 = vector.broadcast %52 : vector<4x8x1xf32> to vector<4x8x8xf32>
    %54 = arith.divf %50, %53 : vector<4x8x8xf32>
    "tpu.trace_start"() <{level = 10 : i32, message = "hqk,hkd->hqd"}> : () -> ()
    %cst_24 = arith.constant dense<0.000000e+00> : vector<4x8x8xf32>
    %55 = tpu.matmul %54, %41, %cst_24 {dimension_numbers = #tpu.dot_dimension_numbers<[2], [1], [1], [2], [0, 0, 0, 1, 1, 2], [0], [0]>} : vector<4x8x8xf32>, vector<4x8x8xf32>, vector<4x8x8xf32> -> vector<4x8x8xf32>
    "tpu.trace_stop"() : () -> ()
    "tpu.trace_start"() <{level = 10 : i32, message = "hqd,hdo->hqo"}> : () -> ()
    %cst_25 = arith.constant dense<0.000000e+00> : vector<4x8x32xf32>
    %56 = tpu.matmul %55, %3, %cst_25 {dimension_numbers = #tpu.dot_dimension_numbers<[2], [1], [1], [2], [0, 0, 0, 1, 1, 2], [0], [0]>} : vector<4x8x8xf32>, vector<4x8x32xf32>, vector<4x8x32xf32> -> vector<4x8x32xf32>
    "tpu.trace_stop"() : () -> ()
    %cst_26 = arith.constant dense<0.000000e+00> : vector<8x32xf32>
    %57 = vector.multi_reduction <add>, %56, %cst_26 [0] : vector<4x8x32xf32> to vector<8x32xf32>
    %58 = arith.addf %57, %12 : vector<8x32xf32>
    %59 = arith.addf %58, %1 : vector<8x32xf32>
    %cst_27 = arith.constant dense<0.000000e+00> : vector<8xf32>
    %60 = vector.multi_reduction <add>, %59, %cst_27 [1] : vector<8x32xf32> to vector<8xf32>
    %61 = vector.shape_cast %60 : vector<8xf32> to vector<8x1xf32>
    %cst_28 = arith.constant 3.200000e+01 : f32
    %62 = vector.broadcast %cst_28 : f32 to vector<8x1xf32>
    %63 = arith.divf %61, %62 : vector<8x1xf32>
    %64 = vector.broadcast %63 : vector<8x1xf32> to vector<8x32xf32>
    %65 = arith.subf %59, %64 : vector<8x32xf32>
    %66 = arith.mulf %65, %65 : vector<8x32xf32>
    %cst_29 = arith.constant dense<0.000000e+00> : vector<8xf32>
    %67 = vector.multi_reduction <add>, %66, %cst_29 [1] : vector<8x32xf32> to vector<8xf32>
    %68 = vector.shape_cast %67 : vector<8xf32> to vector<8x1xf32>
    %cst_30 = arith.constant 3.200000e+01 : f32
    %69 = vector.broadcast %cst_30 : f32 to vector<8x1xf32>
    %70 = arith.divf %68, %69 : vector<8x1xf32>
    %cst_31 = arith.constant 9.99999996E-13 : f32
    %71 = vector.broadcast %cst_31 : f32 to vector<8x1xf32>
    %72 = arith.addf %70, %71 : vector<8x1xf32>
    %73 = math.rsqrt %72 : vector<8x1xf32>
    %74 = vector.broadcast %73 : vector<8x1xf32> to vector<8x32xf32>
    %75 = arith.mulf %65, %74 : vector<8x32xf32>
    %76 = arith.mulf %15, %75 : vector<8x32xf32>
    %77 = arith.addf %76, %18 : vector<8x32xf32>
    %cst_32 = arith.constant dense<0.000000e+00> : vector<8x64xf32>
    %78 = tpu.matmul %77, %4, %cst_32 {dimension_numbers = #tpu.dot_dimension_numbers<[1], [0], [0], [1], [0, 0, 1, 1], [], []>} : vector<8x32xf32>, vector<32x64xf32>, vector<8x64xf32> -> vector<8x64xf32>
    %79 = arith.addf %78, %30 : vector<8x64xf32>
    %cst_33 = arith.constant 5.000000e-01 : f32
    %80 = vector.broadcast %cst_33 : f32 to vector<8x64xf32>
    %81 = arith.mulf %79, %80 : vector<8x64xf32>
    %cst_34 = arith.constant 0.707106769 : f32
    %82 = vector.broadcast %cst_34 : f32 to vector<8x64xf32>
    %83 = arith.mulf %79, %82 : vector<8x64xf32>
    %84 = math.erf %83 : vector<8x64xf32>
    %cst_35 = arith.constant 1.000000e+00 : f32
    %85 = vector.broadcast %cst_35 : f32 to vector<8x64xf32>
    %86 = arith.addf %85, %84 : vector<8x64xf32>
    %87 = arith.mulf %81, %86 : vector<8x64xf32>
    %cst_36 = arith.constant dense<0.000000e+00> : vector<8x32xf32>
    %88 = tpu.matmul %87, %5, %cst_36 {dimension_numbers = #tpu.dot_dimension_numbers<[1], [0], [0], [1], [0, 0, 1, 1], [], []>} : vector<8x64xf32>, vector<64x32xf32>, vector<8x32xf32> -> vector<8x32xf32>
    %89 = arith.addf %88, %21 : vector<8x32xf32>
    %90 = arith.addf %89, %77 : vector<8x32xf32>
    %cst_37 = arith.constant dense<0.000000e+00> : vector<8xf32>
    %91 = vector.multi_reduction <add>, %90, %cst_37 [1] : vector<8x32xf32> to vector<8xf32>
    %92 = vector.shape_cast %91 : vector<8xf32> to vector<8x1xf32>
    %cst_38 = arith.constant 3.200000e+01 : f32
    %93 = vector.broadcast %cst_38 : f32 to vector<8x1xf32>
    %94 = arith.divf %92, %93 : vector<8x1xf32>
    %95 = vector.broadcast %94 : vector<8x1xf32> to vector<8x32xf32>
    %96 = arith.subf %90, %95 : vector<8x32xf32>
    %97 = arith.mulf %96, %96 : vector<8x32xf32>
    %cst_39 = arith.constant dense<0.000000e+00> : vector<8xf32>
    %98 = vector.multi_reduction <add>, %97, %cst_39 [1] : vector<8x32xf32> to vector<8xf32>
    %99 = vector.shape_cast %98 : vector<8xf32> to vector<8x1xf32>
    %cst_40 = arith.constant 3.200000e+01 : f32
    %100 = vector.broadcast %cst_40 : f32 to vector<8x1xf32>
    %101 = arith.divf %99, %100 : vector<8x1xf32>
    %cst_41 = arith.constant 9.99999996E-13 : f32
    %102 = vector.broadcast %cst_41 : f32 to vector<8x1xf32>
    %103 = arith.addf %101, %102 : vector<8x1xf32>
    %104 = math.rsqrt %103 : vector<8x1xf32>
    %105 = vector.broadcast %104 : vector<8x1xf32> to vector<8x32xf32>
    %106 = arith.mulf %96, %105 : vector<8x32xf32>
    %107 = arith.mulf %24, %106 : vector<8x32xf32>
    %108 = arith.addf %107, %27 : vector<8x32xf32>
    %109 = vector.shape_cast %108 : vector<8x32xf32> to vector<1x8x32xf32>
    %110 = vector.shape_cast %109 : vector<1x8x32xf32> to vector<1x8x32xf32>
    %111 = vector.broadcast %110 : vector<1x8x32xf32> to vector<4x8x32xf32>
    "tpu.trace_start"() <{level = 10 : i32, message = "hsd,hde->hse"}> : () -> ()
    %cst_42 = arith.constant dense<0.000000e+00> : vector<4x8x24xf32>
    %112 = tpu.matmul %111, %2, %cst_42 {dimension_numbers = #tpu.dot_dimension_numbers<[2], [1], [1], [2], [0, 0, 0, 1, 1, 2], [0], [0]>} : vector<4x8x32xf32>, vector<4x32x24xf32>, vector<4x8x24xf32> -> vector<4x8x24xf32>
    "tpu.trace_stop"() : () -> ()
    %113 = arith.addf %112, %9 : vector<4x8x24xf32>
    %114 = vector.extract_strided_slice %113 {offsets = [0, 0, 0], sizes = [4, 8, 8], strides = [1, 1, 1]} : vector<4x8x24xf32> to vector<4x8x8xf32>
    %115 = vector.extract_strided_slice %113 {offsets = [0, 0, 8], sizes = [4, 8, 8], strides = [1, 1, 1]} : vector<4x8x24xf32> to vector<4x8x8xf32>
    %116 = vector.extract_strided_slice %113 {offsets = [0, 0, 16], sizes = [4, 8, 8], strides = [1, 1, 1]} : vector<4x8x24xf32> to vector<4x8x8xf32>
    "tpu.trace_start"() <{level = 10 : i32, message = "hqd,hkd->hqk"}> : () -> ()
    %cst_43 = arith.constant dense<0.000000e+00> : vector<4x8x8xf32>
    %117 = tpu.matmul %114, %115, %cst_43 {dimension_numbers = #tpu.dot_dimension_numbers<[2], [2], [1], [1], [0, 0, 0, 1, 1, 1], [0], [0]>} : vector<4x8x8xf32>, vector<4x8x8xf32>, vector<4x8x8xf32> -> vector<4x8x8xf32>
    "tpu.trace_stop"() : () -> ()
    %cst_44 = arith.constant 0.353553385 : f32
    %118 = vector.broadcast %cst_44 : f32 to vector<4x8x8xf32>
    %119 = arith.mulf %117, %118 : vector<4x8x8xf32>
    %120 = arith.addf %119, %33 : vector<4x8x8xf32>
    %cst_45 = arith.constant dense<0xFF800000> : vector<4x8xf32>
    %121 = vector.multi_reduction <maximumf>, %120, %cst_45 [2] : vector<4x8x8xf32> to vector<4x8xf32>
    %122 = vector.shape_cast %121 : vector<4x8xf32> to vector<4x8x1xf32>
    %123 = vector.broadcast %122 : vector<4x8x1xf32> to vector<4x8x8xf32>
    %124 = arith.subf %120, %123 : vector<4x8x8xf32>
    %125 = math.exp %124 : vector<4x8x8xf32>
    %cst_46 = arith.constant dense<0.000000e+00> : vector<4x8xf32>
    %126 = vector.multi_reduction <add>, %125, %cst_46 [2] : vector<4x8x8xf32> to vector<4x8xf32>
    %127 = vector.shape_cast %126 : vector<4x8xf32> to vector<4x8x1xf32>
    %128 = vector.broadcast %127 : vector<4x8x1xf32> to vector<4x8x8xf32>
    %129 = arith.divf %125, %128 : vector<4x8x8xf32>
    "tpu.trace_start"() <{level = 10 : i32, message = "hqk,hkd->hqd"}> : () -> ()
    %cst_47 = arith.constant dense<0.000000e+00> : vector<4x8x8xf32>
    %130 = tpu.matmul %129, %116, %cst_47 {dimension_numbers = #tpu.dot_dimension_numbers<[2], [1], [1], [2], [0, 0, 0, 1, 1, 2], [0], [0]>} : vector<4x8x8xf32>, vector<4x8x8xf32>, vector<4x8x8xf32> -> vector<4x8x8xf32>
    "tpu.trace_stop"() : () -> ()
    "tpu.trace_start"() <{level = 10 : i32, message = "hqd,hdo->hqo"}> : () -> ()
    %cst_48 = arith.constant dense<0.000000e+00> : vector<4x8x32xf32>
    %131 = tpu.matmul %130, %3, %cst_48 {dimension_numbers = #tpu.dot_dimension_numbers<[2], [1], [1], [2], [0, 0, 0, 1, 1, 2], [0], [0]>} : vector<4x8x8xf32>, vector<4x8x32xf32>, vector<4x8x32xf32> -> vector<4x8x32xf32>
    "tpu.trace_stop"() : () -> ()
    %cst_49 = arith.constant dense<0.000000e+00> : vector<8x32xf32>
    %132 = vector.multi_reduction <add>, %131, %cst_49 [0] : vector<4x8x32xf32> to vector<8x32xf32>
    %133 = arith.addf %132, %12 : vector<8x32xf32>
    %134 = arith.addf %133, %108 : vector<8x32xf32>
    %cst_50 = arith.constant dense<0.000000e+00> : vector<8xf32>
    %135 = vector.multi_reduction <add>, %134, %cst_50 [1] : vector<8x32xf32> to vector<8xf32>
    %136 = vector.shape_cast %135 : vector<8xf32> to vector<8x1xf32>
    %cst_51 = arith.constant 3.200000e+01 : f32
    %137 = vector.broadcast %cst_51 : f32 to vector<8x1xf32>
    %138 = arith.divf %136, %137 : vector<8x1xf32>
    %139 = vector.broadcast %138 : vector<8x1xf32> to vector<8x32xf32>
    %140 = arith.subf %134, %139 : vector<8x32xf32>
    %141 = arith.mulf %140, %140 : vector<8x32xf32>
    %cst_52 = arith.constant dense<0.000000e+00> : vector<8xf32>
    %142 = vector.multi_reduction <add>, %141, %cst_52 [1] : vector<8x32xf32> to vector<8xf32>
    %143 = vector.shape_cast %142 : vector<8xf32> to vector<8x1xf32>
    %cst_53 = arith.constant 3.200000e+01 : f32
    %144 = vector.broadcast %cst_53 : f32 to vector<8x1xf32>
    %145 = arith.divf %143, %144 : vector<8x1xf32>
    %cst_54 = arith.constant 9.99999996E-13 : f32
    %146 = vector.broadcast %cst_54 : f32 to vector<8x1xf32>
    %147 = arith.addf %145, %146 : vector<8x1xf32>
    %148 = math.rsqrt %147 : vector<8x1xf32>
    %149 = vector.broadcast %148 : vector<8x1xf32> to vector<8x32xf32>
    %150 = arith.mulf %140, %149 : vector<8x32xf32>
    %151 = arith.mulf %15, %150 : vector<8x32xf32>
    %152 = arith.addf %151, %18 : vector<8x32xf32>
    %cst_55 = arith.constant dense<0.000000e+00> : vector<8x64xf32>
    %153 = tpu.matmul %152, %4, %cst_55 {dimension_numbers = #tpu.dot_dimension_numbers<[1], [0], [0], [1], [0, 0, 1, 1], [], []>} : vector<8x32xf32>, vector<32x64xf32>, vector<8x64xf32> -> vector<8x64xf32>
    %154 = arith.addf %153, %30 : vector<8x64xf32>
    %cst_56 = arith.constant 5.000000e-01 : f32
    %155 = vector.broadcast %cst_56 : f32 to vector<8x64xf32>
    %156 = arith.mulf %154, %155 : vector<8x64xf32>
    %cst_57 = arith.constant 0.707106769 : f32
    %157 = vector.broadcast %cst_57 : f32 to vector<8x64xf32>
    %158 = arith.mulf %154, %157 : vector<8x64xf32>
    %159 = math.erf %158 : vector<8x64xf32>
    %cst_58 = arith.constant 1.000000e+00 : f32
    %160 = vector.broadcast %cst_58 : f32 to vector<8x64xf32>
    %161 = arith.addf %160, %159 : vector<8x64xf32>
    %162 = arith.mulf %156, %161 : vector<8x64xf32>
    %cst_59 = arith.constant dense<0.000000e+00> : vector<8x32xf32>
    %163 = tpu.matmul %162, %5, %cst_59 {dimension_numbers = #tpu.dot_dimension_numbers<[1], [0], [0], [1], [0, 0, 1, 1], [], []>} : vector<8x64xf32>, vector<64x32xf32>, vector<8x32xf32> -> vector<8x32xf32>
    %164 = arith.addf %163, %21 : vector<8x32xf32>
    %165 = arith.addf %164, %152 : vector<8x32xf32>
    %cst_60 = arith.constant dense<0.000000e+00> : vector<8xf32>
    %166 = vector.multi_reduction <add>, %165, %cst_60 [1] : vector<8x32xf32> to vector<8xf32>
    %167 = vector.shape_cast %166 : vector<8xf32> to vector<8x1xf32>
    %cst_61 = arith.constant 3.200000e+01 : f32
    %168 = vector.broadcast %cst_61 : f32 to vector<8x1xf32>
    %169 = arith.divf %167, %168 : vector<8x1xf32>
    %170 = vector.broadcast %169 : vector<8x1xf32> to vector<8x32xf32>
    %171 = arith.subf %165, %170 : vector<8x32xf32>
    %172 = arith.mulf %171, %171 : vector<8x32xf32>
    %cst_62 = arith.constant dense<0.000000e+00> : vector<8xf32>
    %173 = vector.multi_reduction <add>, %172, %cst_62 [1] : vector<8x32xf32> to vector<8xf32>
    %174 = vector.shape_cast %173 : vector<8xf32> to vector<8x1xf32>
    %cst_63 = arith.constant 3.200000e+01 : f32
    %175 = vector.broadcast %cst_63 : f32 to vector<8x1xf32>
    %176 = arith.divf %174, %175 : vector<8x1xf32>
    %cst_64 = arith.constant 9.99999996E-13 : f32
    %177 = vector.broadcast %cst_64 : f32 to vector<8x1xf32>
    %178 = arith.addf %176, %177 : vector<8x1xf32>
    %179 = math.rsqrt %178 : vector<8x1xf32>
    %180 = vector.broadcast %179 : vector<8x1xf32> to vector<8x32xf32>
    %181 = arith.mulf %171, %180 : vector<8x32xf32>
    %182 = arith.mulf %24, %181 : vector<8x32xf32>
    %183 = arith.addf %182, %27 : vector<8x32xf32>
    %c0_65 = arith.constant 0 : index
    %c0_66 = arith.constant 0 : index
    %c0_67 = arith.constant 0 : index
    %184 = vector.load %arg9[%c0_65, %c0_66, %c0_67] : memref<1x8x32xf32, #tpu.memory_space<vmem>>, vector<1x8x32xf32>
    %185 = vector.shape_cast %184 : vector<1x8x32xf32> to vector<8x32xf32>
    %186 = vector.shape_cast %183 : vector<8x32xf32> to vector<1x8x32xf32>
    tpu.vector_store %arg9[%c0_65, %c0_66, %c0_67], %186 {strides = array<i32>} : memref<1x8x32xf32, #tpu.memory_space<vmem>>, vector<1x8x32xf32>,
    return
  }
  func.func @transform_0(%arg0: i32) -> (i32, i32, i32) {
    %c0_i32 = arith.constant 0 : i32
    %c0_i32_0 = arith.constant 0 : i32
    %c0_i32_1 = arith.constant 0 : i32
    return %arg0, %c0_i32, %c0_i32_0 : i32, i32, i32
  }
  func.func @transform_1(%arg0: i32) -> (i32, i32, i32) {
    %c0_i32 = arith.constant 0 : i32
    %c0_i32_0 = arith.constant 0 : i32
    %c0_i32_1 = arith.constant 0 : i32
    return %arg0, %c0_i32, %c0_i32_0 : i32, i32, i32
  }
  func.func @transform_2(%arg0: i32) -> (i32, i32, i32) {
    %c0_i32 = arith.constant 0 : i32
    %c0_i32_0 = arith.constant 0 : i32
    %c0_i32_1 = arith.constant 0 : i32
    %c0_i32_2 = arith.constant 0 : i32
    return %c0_i32, %c0_i32_0, %c0_i32_1 : i32, i32, i32
  }
  func.func @transform_3(%arg0: i32) -> (i32, i32, i32) {
    %c0_i32 = arith.constant 0 : i32
    %c0_i32_0 = arith.constant 0 : i32
    %c0_i32_1 = arith.constant 0 : i32
    %c0_i32_2 = arith.constant 0 : i32
    return %c0_i32, %c0_i32_0, %c0_i32_1 : i32, i32, i32
  }
  func.func @transform_4(%arg0: i32) -> (i32, i32, i32) {
    %c0_i32 = arith.constant 0 : i32
    %c0_i32_0 = arith.constant 0 : i32
    %c0_i32_1 = arith.constant 0 : i32
    %c0_i32_2 = arith.constant 0 : i32
    return %c0_i32, %c0_i32_0, %c0_i32_1 : i32, i32, i32
  }
  func.func @transform_5(%arg0: i32) -> (i32, i32) {
    %c0_i32 = arith.constant 0 : i32
    %c0_i32_0 = arith.constant 0 : i32
    %c0_i32_1 = arith.constant 0 : i32
    return %c0_i32, %c0_i32_0 : i32, i32
  }
  func.func @transform_6(%arg0: i32) -> (i32, i32) {
    %c0_i32 = arith.constant 0 : i32
    %c0_i32_0 = arith.constant 0 : i32
    %c0_i32_1 = arith.constant 0 : i32
    return %c0_i32, %c0_i32_0 : i32, i32
  }
  func.func @transform_7(%arg0: i32) -> (i32, i32) {
    %c0_i32 = arith.constant 0 : i32
    %c0_i32_0 = arith.constant 0 : i32
    %c0_i32_1 = arith.constant 0 : i32
    return %c0_i32, %c0_i32_0 : i32, i32
  }
  func.func @transform_8(%arg0: i32) -> (i32, i32, i32) {
    %c0_i32 = arith.constant 0 : i32
    %c0_i32_0 = arith.constant 0 : i32
    %c0_i32_1 = arith.constant 0 : i32
    return %arg0, %c0_i32, %c0_i32_0 : i32, i32, i32
  }
}

</mosaic_0001>

<llo_original>
// kernel: tpu_custom_call.1
$region0: #{tpu_custom_call.1}
  #allocation0 [shape = 'u32[]', space=smem, size = 0x4, offset = 0x4, fixed_abs, tag = 'smem constant byte address 0x4 - core index']
  #allocation1 [shape = 'u32[72,128]{1,0:T(1,128)}', space=vmem, size = 0x9000, scoped, tag = 'internal scratch']
  %s0 = inlined_call_operand.vmem [shape: f32[2,8,32], index: 0, kind: input, shape index: {}]
  %s1 = inlined_call_operand.vmem [shape: f32[2,1,8], index: 1, kind: input, shape index: {}]
  %s2 = inlined_call_operand.vmem [shape: f32[4,32,24], index: 2, kind: input, shape index: {}]
  %s3 = inlined_call_operand.vmem [shape: f32[4,1,24], index: 3, kind: input, shape index: {}]
  %s4 = inlined_call_operand.vmem [shape: f32[4,8,32], index: 4, kind: input, shape index: {}]
  %s5 = inlined_call_operand.vmem [shape: f32[32,64], index: 5, kind: input, shape index: {}]
  %s6 = inlined_call_operand.vmem [shape: f32[64,32], index: 6, kind: input, shape index: {}]
  %s7 = inlined_call_operand.vmem [shape: f32[8,64], index: 7, kind: input, shape index: {}]
  %s8 = inlined_call_operand.hbm [shape: f32[2,8,32], index: 8, kind: output, shape index: {}]
  %s9 = sld [smem:[#allocation0]]
  $region65: #{tpu_custom_call.1} parent=0
    _
  %s11 = ssub.s32 1, %s9
  %s12 = scalar_select 0, %s11, %s9
  $region1: #{tpu_custom_call.1} parent=0
    #allocation2 [shape = 'u8[8192]{0}', space=vmem, size = 0x2000, scoped, tag = 'output window, operand 0']
    #allocation3 [shape = 's32[2]{0}', space=sflag, size = 0x8, scoped, tag = 'scoped memory for tpu_custom_call.1']
    %13 = vsyncpa [#allocation3], 0
    %s14 = scalar_lea.sflag [#allocation3], 1
    %15 = vsyncpa %s14, 0
    loop: start=0, step=1, limit=4
    $region2: #{tpu_custom_call.1} parent=1 // loop_pre_header
      _
    $region3: #{tpu_custom_call.1} parent=1 // loop_header
      %s17 = sphi 0, %s21
      %p18 = scmp.ge.s32.totalorder %s17, 4
      %s27 = sphi 0, %s29
      %s30 = sphi 0, %s27
      %s31 = sphi 0, %s30
      %s47 = sphi 0, %s31
      %s53 = sphi 0, %s55
      %s56 = sphi 0, %s53
      %s57 = sphi 0, %s56
      %s73 = sphi 0, %s57
      %s77 = sphi 0, %s77
      %s79 = sphi 0, %s77
      %s80 = sphi 0, %s79
      %s94 = sphi 0, %s80
      %s98 = sphi 0, %s98
      %s100 = sphi 0, %s98
      %s101 = sphi 0, %s100
      %s115 = sphi 0, %s101
      %s119 = sphi 0, %s119
      %s121 = sphi 0, %s119
      %s122 = sphi 0, %s121
      %s136 = sphi 0, %s122
      %s140 = sphi 0, %s140
      %s142 = sphi 0, %s140
      %s143 = sphi 0, %s142
      %s157 = sphi 0, %s143
      %s161 = sphi 0, %s161
      %s163 = sphi 0, %s161
      %s164 = sphi 0, %s163
      %s178 = sphi 0, %s164
      %s182 = sphi 0, %s182
      %s184 = sphi 0, %s182
      %s185 = sphi 0, %s184
      %s199 = sphi 0, %s185
      %s205 = sphi 0, %s207
      %s208 = sphi 0, %s205
      %s209 = sphi 0, %s208
      %s225 = sphi 0, %s209
    $region4: #{tpu_custom_call.1} parent=1 // loop_header_branch
      %20 = sbr.rel (%p18) target = $region8
    $region5: #{tpu_custom_call.1} parent=1 // loop_body
      %s22 = ssub.s32 %s17, 1
      %s23 = ssub.s32 %s17, 2
      %s24 = sadd.s32 %s17, 1
      %s25 = ssub.s32 %s17, %s24
      %p26 = scmp.eq.s32.totalorder %s25, 0
      %s28 = sadd.s32 %s27, 1
      %s29 = scalar_select %p26, %s27, %s28
      %p32 = pneg %p26
      %p33 = scmp.eq.s32.totalorder %s17, 1
      %p34 = por %p32, %p33
      %p35 = scmp.ne.s32.totalorder %s27, %s30
      %p36 = scmp.eq.s32.totalorder %s17, 0
      %p37 = por %p35, %p36
      %p38 = scmp.ne.s32.totalorder %s27, %s30
      %p39 = scmp.eq.s32.totalorder %s22, 1
      %p40 = por %p38, %p39
      %p41 = scmp.ne.s32.totalorder %s30, %s31
      %p42 = scmp.eq.s32.totalorder %s22, 0
      %p43 = por %p41, %p42
      %p44 = scmp.ne.s32.totalorder %s30, %s31
      %p45 = scmp.eq.s32.totalorder %s23, 1
      %p46 = por %p44, %p45
      %p48 = scmp.ne.s32.totalorder %s31, %s47
      %p49 = scmp.eq.s32.totalorder %s23, 0
      %p50 = por %p48, %p49
      %s51 = ssub.s32 %s17, %s24
      %p52 = scmp.eq.s32.totalorder %s51, 0
      %s54 = sadd.s32 %s53, 1
      %s55 = scalar_select %p52, %s53, %s54
      %p58 = pneg %p52
      %p59 = scmp.eq.s32.totalorder %s17, 1
      %p60 = por %p58, %p59
      %p61 = scmp.ne.s32.totalorder %s53, %s56
      %p62 = scmp.eq.s32.totalorder %s17, 0
      %p63 = por %p61, %p62
      %p64 = scmp.ne.s32.totalorder %s53, %s56
      %p65 = scmp.eq.s32.totalorder %s22, 1
      %p66 = por %p64, %p65
      %p67 = scmp.ne.s32.totalorder %s56, %s57
      %p68 = scmp.eq.s32.totalorder %s22, 0
      %p69 = por %p67, %p68
      %p70 = scmp.ne.s32.totalorder %s56, %s57
      %p71 = scmp.eq.s32.totalorder %s23, 1
      %p72 = por %p70, %p71
      %p74 = scmp.ne.s32.totalorder %s57, %s73
      %p75 = scmp.eq.s32.totalorder %s23, 0
      %p76 = por %p74, %p75
      %s78 = sadd.s32 %s77, 1
      %p81 = scmp.eq.s32.totalorder %s17, 1
      %p82 = scmp.ne.s32.totalorder %s77, %s79
      %p83 = scmp.eq.s32.totalorder %s17, 0
      %p84 = por %p82, %p83
      %p85 = scmp.ne.s32.totalorder %s77, %s79
      %p86 = scmp.eq.s32.totalorder %s22, 1
      %p87 = por %p85, %p86
      %p88 = scmp.ne.s32.totalorder %s79, %s80
      %p89 = scmp.eq.s32.totalorder %s22, 0
      %p90 = por %p88, %p89
      %p91 = scmp.ne.s32.totalorder %s79, %s80
      %p92 = scmp.eq.s32.totalorder %s23, 1
      %p93 = por %p91, %p92
      %p95 = scmp.ne.s32.totalorder %s80, %s94
      %p96 = scmp.eq.s32.totalorder %s23, 0
      %p97 = por %p95, %p96
      %s99 = sadd.s32 %s98, 1
      %p102 = scmp.eq.s32.totalorder %s17, 1
      %p103 = scmp.ne.s32.totalorder %s98, %s100
      %p104 = scmp.eq.s32.totalorder %s17, 0
      %p105 = por %p103, %p104
      %p106 = scmp.ne.s32.totalorder %s98, %s100
      %p107 = scmp.eq.s32.totalorder %s22, 1
      %p108 = por %p106, %p107
      %p109 = scmp.ne.s32.totalorder %s100, %s101
      %p110 = scmp.eq.s32.totalorder %s22, 0
      %p111 = por %p109, %p110
      %p112 = scmp.ne.s32.totalorder %s100, %s101
      %p113 = scmp.eq.s32.totalorder %s23, 1
      %p114 = por %p112, %p113
      %p116 = scmp.ne.s32.totalorder %s101, %s115
      %p117 = scmp.eq.s32.totalorder %s23, 0
      %p118 = por %p116, %p117
      %s120 = sadd.s32 %s119, 1
      %p123 = scmp.eq.s32.totalorder %s17, 1
      %p124 = scmp.ne.s32.totalorder %s119, %s121
      %p125 = scmp.eq.s32.totalorder %s17, 0
      %p126 = por %p124, %p125
      %p127 = scmp.ne.s32.totalorder %s119, %s121
      %p128 = scmp.eq.s32.totalorder %s22, 1
      %p129 = por %p127, %p128
      %p130 = scmp.ne.s32.totalorder %s121, %s122
      %p131 = scmp.eq.s32.totalorder %s22, 0
      %p132 = por %p130, %p131
      %p133 = scmp.ne.s32.totalorder %s121, %s122
      %p134 = scmp.eq.s32.totalorder %s23, 1
      %p135 = por %p133, %p134
      %p137 = scmp.ne.s32.totalorder %s122, %s136
      %p138 = scmp.eq.s32.totalorder %s23, 0
      %p139 = por %p137, %p138
      %s141 = sadd.s32 %s140, 1
      %p144 = scmp.eq.s32.totalorder %s17, 1
      %p145 = scmp.ne.s32.totalorder %s140, %s142
      %p146 = scmp.eq.s32.totalorder %s17, 0
      %p147 = por %p145, %p146
      %p148 = scmp.ne.s32.totalorder %s140, %s142
      %p149 = scmp.eq.s32.totalorder %s22, 1
      %p150 = por %p148, %p149
      %p151 = scmp.ne.s32.totalorder %s142, %s143
      %p152 = scmp.eq.s32.totalorder %s22, 0
      %p153 = por %p151, %p152
      %p154 = scmp.ne.s32.totalorder %s142, %s143
      %p155 = scmp.eq.s32.totalorder %s23, 1
      %p156 = por %p154, %p155
      %p158 = scmp.ne.s32.totalorder %s143, %s157
      %p159 = scmp.eq.s32.totalorder %s23, 0
      %p160 = por %p158, %p159
      %s162 = sadd.s32 %s161, 1
      %p165 = scmp.eq.s32.totalorder %s17, 1
      %p166 = scmp.ne.s32.totalorder %s161, %s163
      %p167 = scmp.eq.s32.totalorder %s17, 0
      %p168 = por %p166, %p167
      %p169 = scmp.ne.s32.totalorder %s161, %s163
      %p170 = scmp.eq.s32.totalorder %s22, 1
      %p171 = por %p169, %p170
      %p172 = scmp.ne.s32.totalorder %s163, %s164
      %p173 = scmp.eq.s32.totalorder %s22, 0
      %p174 = por %p172, %p173
      %p175 = scmp.ne.s32.totalorder %s163, %s164
      %p176 = scmp.eq.s32.totalorder %s23, 1
      %p177 = por %p175, %p176
      %p179 = scmp.ne.s32.totalorder %s164, %s178
      %p180 = scmp.eq.s32.totalorder %s23, 0
      %p181 = por %p179, %p180
      %s183 = sadd.s32 %s182, 1
      %p186 = scmp.eq.s32.totalorder %s17, 1
      %p187 = scmp.ne.s32.totalorder %s182, %s184
      %p188 = scmp.eq.s32.totalorder %s17, 0
      %p189 = por %p187, %p188
      %p190 = scmp.ne.s32.totalorder %s182, %s184
      %p191 = scmp.eq.s32.totalorder %s22, 1
      %p192 = por %p190, %p191
      %p193 = scmp.ne.s32.totalorder %s184, %s185
      %p194 = scmp.eq.s32.totalorder %s22, 0
      %p195 = por %p193, %p194
      %p196 = scmp.ne.s32.totalorder %s184, %s185
      %p197 = scmp.eq.s32.totalorder %s23, 1
      %p198 = por %p196, %p197
      %p200 = scmp.ne.s32.totalorder %s185, %s199
      %p201 = scmp.eq.s32.totalorder %s23, 0
      %p202 = por %p200, %p201
      %s203 = ssub.s32 %s17, %s24
      %p204 = scmp.eq.s32.totalorder %s203, 0
      %s206 = sadd.s32 %s205, 1
      %s207 = scalar_select %p204, %s205, %s206
      %p210 = pneg %p204
      %p211 = scmp.eq.s32.totalorder %s17, 1
      %p212 = por %p210, %p211
      %p213 = scmp.ne.s32.totalorder %s205, %s208
      %p214 = scmp.eq.s32.totalorder %s17, 0
      %p215 = por %p213, %p214
      %p216 = scmp.ne.s32.totalorder %s205, %s208
      %p217 = scmp.eq.s32.totalorder %s22, 1
      %p218 = por %p216, %p217
      %p219 = scmp.ne.s32.totalorder %s208, %s209
      %p220 = scmp.eq.s32.totalorder %s22, 0
      %p221 = por %p219, %p220
      %p222 = scmp.ne.s32.totalorder %s208, %s209
      %p223 = scmp.eq.s32.totalorder %s23, 1
      %p224 = por %p222, %p223
      %p226 = scmp.ne.s32.totalorder %s209, %s225
      %p227 = scmp.eq.s32.totalorder %s23, 0
      %p228 = por %p226, %p227
      %p229 = scmp.le.s32.totalorder 1, %s17
      %p230 = scmp.lt.s32.totalorder %s17, 3
      %p231 = pnand %p229, %p230
      %p232 = pneg %p231
      // Predicated region
      $region9: #{tpu_custom_call.1} parent=5 // pred_check
        _
      $region10: #{tpu_custom_call.1} parent=5 // pred_check_branch
        %234 = sbr.rel (%p231) target = $region12
      $region11: #{tpu_custom_call.1} parent=5 // pred_region
        %s235 = ssub.s32 %s17, 1
        // Predicated region
        $region13: #{tpu_custom_call.1} parent=11 // pred_check
          %p236 = pneg %p90
        $region14: #{tpu_custom_call.1} parent=11 // pred_check_branch
          %238 = sbr.rel (%p236) target = $region16
        $region15: #{tpu_custom_call.1} parent=11 // pred_region
          _
        $region16: #{tpu_custom_call.1} parent=11 // pred_fallthru
          _
        // Predicated region
        $region17: #{tpu_custom_call.1} parent=11 // pred_check
          %p239 = pneg %p111
        $region18: #{tpu_custom_call.1} parent=11 // pred_check_branch
          %241 = sbr.rel (%p239) target = $region20
        $region19: #{tpu_custom_call.1} parent=11 // pred_region
          _
        $region20: #{tpu_custom_call.1} parent=11 // pred_fallthru
          _
        // Predicated region
        $region21: #{tpu_custom_call.1} parent=11 // pred_check
          %p242 = pneg %p132
        $region22: #{tpu_custom_call.1} parent=11 // pred_check_branch
          %244 = sbr.rel (%p242) target = $region24
        $region23: #{tpu_custom_call.1} parent=11 // pred_region
          _
        $region24: #{tpu_custom_call.1} parent=11 // pred_fallthru
          _
        // Predicated region
        $region25: #{tpu_custom_call.1} parent=11 // pred_check
          %p245 = pneg %p153
        $region26: #{tpu_custom_call.1} parent=11 // pred_check_branch
          %247 = sbr.rel (%p245) target = $region28
        $region27: #{tpu_custom_call.1} parent=11 // pred_region
          _
        $region28: #{tpu_custom_call.1} parent=11 // pred_fallthru
          _
        // Predicated region
        $region29: #{tpu_custom_call.1} parent=11 // pred_check
          %p248 = pneg %p174
        $region30: #{tpu_custom_call.1} parent=11 // pred_check_branch
          %250 = sbr.rel (%p248) target = $region32
        $region31: #{tpu_custom_call.1} parent=11 // pred_region
          _
        $region32: #{tpu_custom_call.1} parent=11 // pred_fallthru
          _
        // Predicated region
        $region33: #{tpu_custom_call.1} parent=11 // pred_check
          %p251 = pneg %p195
        $region34: #{tpu_custom_call.1} parent=11 // pred_check_branch
          %253 = sbr.rel (%p251) target = $region36
        $region35: #{tpu_custom_call.1} parent=11 // pred_region
          _
        $region36: #{tpu_custom_call.1} parent=11 // pred_fallthru
          _
      $region12: #{tpu_custom_call.1} parent=5 // pred_fallthru
        _
      %p254 = scmp.lt.s32.totalorder %s17, 2
      // Predicated region
      $region37: #{tpu_custom_call.1} parent=5 // pred_check
        %p255 = pneg %p254
      $region38: #{tpu_custom_call.1} parent=5 // pred_check_branch
        %257 = sbr.rel (%p255) target = $region40
      $region39: #{tpu_custom_call.1} parent=5 // pred_region
        // Predicated region
        $region41: #{tpu_custom_call.1} parent=39 // pred_check
          %p258 = pneg %p37
        $region42: #{tpu_custom_call.1} parent=39 // pred_check_branch
          %260 = sbr.rel (%p258) target = $region44
        $region43: #{tpu_custom_call.1} parent=39 // pred_region
          %p261 = scmp.lt.s32.totalorder %s17, 1
          %s262 = scalar_select %p261, %s17, 1
          %s263 = smul.addr %s262, 8
          %s264 = scalar_lea.vmem %s0, %s263
        $region44: #{tpu_custom_call.1} parent=39 // pred_fallthru
          _
        // Predicated region
        $region45: #{tpu_custom_call.1} parent=39 // pred_check
          %p265 = pneg %p63
        $region46: #{tpu_custom_call.1} parent=39 // pred_check_branch
          %267 = sbr.rel (%p265) target = $region48
        $region47: #{tpu_custom_call.1} parent=39 // pred_region
          %p268 = scmp.lt.s32.totalorder %s17, 1
          %s269 = scalar_select %p268, %s17, 1
          %s270 = scalar_lea.vmem %s1, %s269
        $region48: #{tpu_custom_call.1} parent=39 // pred_fallthru
          _
      $region40: #{tpu_custom_call.1} parent=5 // pred_fallthru
        _
      %p271 = scmp.le.s32.totalorder 1, %s17
      %p272 = scmp.lt.s32.totalorder %s17, 3
      %p273 = pnand %p271, %p272
      %p274 = pneg %p273
      // Predicated region
      $region49: #{tpu_custom_call.1} parent=5 // pred_check
        _
      $region50: #{tpu_custom_call.1} parent=5 // pred_check_branch
        %276 = sbr.rel (%p273) target = $region52
      $region51: #{tpu_custom_call.1} parent=5 // pred_region
        %s277 = ssub.s32 %s17, 1
        %p278 = scmp.lt.s32.totalorder %s22, 1
        %s279 = scalar_select %p278, %s22, 1
        %s280 = smul.addr %s279, 8
        %s281 = scalar_lea.vmem %s0, %s280
        %p282 = pneg %p43
        %p283 = pneg %p40
        %p284 = scmp.lt.s32.totalorder %s22, 1
        %s285 = scalar_select %p284, %s22, 1
        %s286 = scalar_lea.vmem %s1, %s285
        %p287 = pneg %p69
        %p288 = pneg %p66
        %p289 = pneg %p90
        %p290 = pneg %p87
        %p291 = pneg %p111
        %p292 = pneg %p108
        %p293 = pneg %p132
        %p294 = pneg %p129
        %p295 = pneg %p153
        %p296 = pneg %p150
        %p297 = pneg %p174
        %p298 = pneg %p171
        %p299 = pneg %p195
        %p300 = pneg %p192
        %p301 = pneg %p221
        %p302 = pneg %p218
        %s303 = sand.u32 %s208, 1
        %s304 = scalar_lea.sflag [#allocation3], %s303
        %s305 = sand.u32 %s208, 1
        %s306 = smul.addr %s305, 8
        %s307 = scalar_lea.vmem [#allocation2], %s306
        %p308 = scmp.lt.s32.totalorder %s22, 1
        %s309 = scalar_select %p308, %s22, 1
        %s310 = smul.addr %s309, 8
        %s311 = scalar_lea.vmem %s0, %s310
        %p312 = scmp.lt.s32.totalorder %s22, 1
        %s313 = scalar_select %p312, %s22, 1
        %s314 = scalar_lea.vmem %s1, %s313
        %v315 = vld [vmem:[%s311] sm:$0xff]
        %v316 = vld [vmem:[%s2] sm:$0xff]
        %v317 = vld [vmem:[%s2 + $0x8] sm:$0xff]
        %v318 = vld [vmem:[%s2 + $0x10] sm:$0xff]
        %v319 = vld [vmem:[%s2 + $0x18] sm:$0xff]
        %v320 = vld [vmem:[%s2 + $0x20] sm:$0xff]
        %v321 = vld [vmem:[%s2 + $0x28] sm:$0xff]
        %v322 = vld [vmem:[%s2 + $0x30] sm:$0xff]
        %v323 = vld [vmem:[%s2 + $0x38] sm:$0xff]
        %v324 = vld [vmem:[%s2 + $0x40] sm:$0xff]
        %v325 = vld [vmem:[%s2 + $0x48] sm:$0xff]
        %v326 = vld [vmem:[%s2 + $0x50] sm:$0xff]
        %v327 = vld [vmem:[%s2 + $0x58] sm:$0xff]
        %v328 = vld [vmem:[%s2 + $0x60] sm:$0xff]
        %v329 = vld [vmem:[%s2 + $0x68] sm:$0xff]
        %v330 = vld [vmem:[%s2 + $0x70] sm:$0xff]
        %v331 = vld [vmem:[%s2 + $0x78] sm:$0xff]
        %v332 = vld [vmem:[%s4] sm:$0xff]
        %v333 = vld [vmem:[%s4 + $0x8] sm:$0xff]
        %v334 = vld [vmem:[%s4 + $0x10] sm:$0xff]
        %v335 = vld [vmem:[%s4 + $0x18] sm:$0xff]
        %v336 = vld [vmem:[%s5] sm:$0xff]
        %v337 = vld [vmem:[%s5 + $0x8] sm:$0xff]
        %v338 = vld [vmem:[%s5 + $0x10] sm:$0xff]
        %v339 = vld [vmem:[%s5 + $0x18] sm:$0xff]
        %v340 = vld [vmem:[%s6] sm:$0xff]
        %v341 = vld [vmem:[%s6 + $0x8] sm:$0xff]
        %v342 = vld [vmem:[%s6 + $0x10] sm:$0xff]
        %v343 = vld [vmem:[%s6 + $0x18] sm:$0xff]
        %v344 = vld [vmem:[%s6 + $0x20] sm:$0xff]
        %v345 = vld [vmem:[%s6 + $0x28] sm:$0xff]
        %v346 = vld [vmem:[%s6 + $0x30] sm:$0xff]
        %v347 = vld [vmem:[%s6 + $0x38] sm:$0xff]
        %v348 = vld [vmem:[%s7] sm:$0xff]
        %v349 = vld [vmem:[%s3] sm:$0x1]
        %v350 = vld [vmem:[%s3 + $0x1] sm:$0x1]
        %v351 = vld [vmem:[%s3 + $0x2] sm:$0x1]
        %v352 = vld [vmem:[%s3 + $0x3] sm:$0x1]
        %v357 = vperm.slane %v349, 0
        %v358 = vperm.slane %v350, 0
        %v359 = vperm.slane %v351, 0
        %v360 = vperm.slane %v352, 0
        %v365 = vperm.slane %v348, 0
        %v366 = vperm.slane %v348, 1
        %v367 = vperm.slane %v348, 2
        %v368 = vperm.slane %v348, 3
        %v369 = vperm.slane %v348, 4
        %v370 = vperm.slane %v348, 5
        %v371 = vperm.slane %v348, 6
        %v372 = vld [vmem:[%s314] sm:$0x1]
        %v374 = vperm.slane %v372, 0
        %vm376 = vcmask 261120
        %v378 = vsel %vm376, %v315, 0
        %380 = vmatpush.msra.mxu0 0.0
        %381 = vmatpush.msra.mxu0 0.0
        %382 = vmatpush.msra.mxu0 0.0
        %383 = vmatpush.msra.mxu0 0.0
        %384 = vmatpush.msra.mxu0 0.0
        %385 = vmatpush.msra.mxu0 0.0
        %386 = vmatpush.msra.mxu0 0.0
        %387 = vmatpush.msra.mxu0 0.0
        %388 = vmatpush.msra.mxu0 0.0
        %389 = vmatpush.msra.mxu0 0.0
        %390 = vmatpush.msra.mxu0 0.0
        %391 = vmatpush.msra.mxu0 0.0
        %392 = vmatpush.msra.mxu0 %v319
        %393 = vmatpush.msra.mxu0 %v318
        %394 = vmatpush.msra.mxu0 %v317
        %395 = vmatpush.msra.mxu0 %v316
        %396 = vmatmul.f32.gmra.mxu0 %v378
        %v397 = vpop.f32.mrf.mxu0
        %v398 = vadd.f32 %v357, %v397
        %399 = vdwg.mxu0
        %400 = vmatpush.msra.mxu0 0.0
        %401 = vmatpush.msra.mxu0 0.0
        %402 = vmatpush.msra.mxu0 0.0
        %403 = vmatpush.msra.mxu0 0.0
        %404 = vmatpush.msra.mxu0 0.0
        %405 = vmatpush.msra.mxu0 0.0
        %406 = vmatpush.msra.mxu0 0.0
        %407 = vmatpush.msra.mxu0 0.0
        %408 = vmatpush.msra.mxu0 0.0
        %409 = vmatpush.msra.mxu0 0.0
        %410 = vmatpush.msra.mxu0 0.0
        %411 = vmatpush.msra.mxu0 0.0
        %412 = vmatpush.msra.mxu0 %v323
        %413 = vmatpush.msra.mxu0 %v322
        %414 = vmatpush.msra.mxu0 %v321
        %415 = vmatpush.msra.mxu0 %v320
        %416 = vmatmul.f32.gmra.mxu0 %v378
        %v417 = vpop.f32.mrf.mxu0
        %v418 = vadd.f32 %v358, %v417
        %419 = vdwg.mxu0
        %420 = vmatpush.msra.mxu0 0.0
        %421 = vmatpush.msra.mxu0 0.0
        %422 = vmatpush.msra.mxu0 0.0
        %423 = vmatpush.msra.mxu0 0.0
        %424 = vmatpush.msra.mxu0 0.0
        %425 = vmatpush.msra.mxu0 0.0
        %426 = vmatpush.msra.mxu0 0.0
        %427 = vmatpush.msra.mxu0 0.0
        %428 = vmatpush.msra.mxu0 0.0
        %429 = vmatpush.msra.mxu0 0.0
        %430 = vmatpush.msra.mxu0 0.0
        %431 = vmatpush.msra.mxu0 0.0
        %432 = vmatpush.msra.mxu0 %v327
        %433 = vmatpush.msra.mxu0 %v326
        %434 = vmatpush.msra.mxu0 %v325
        %435 = vmatpush.msra.mxu0 %v324
        %436 = vmatmul.f32.gmra.mxu0 %v378
        %v437 = vpop.f32.mrf.mxu0
        %v438 = vadd.f32 %v359, %v437
        %439 = vdwg.mxu0
        %440 = vmatpush.msra.mxu0 0.0
        %441 = vmatpush.msra.mxu0 0.0
        %442 = vmatpush.msra.mxu0 0.0
        %443 = vmatpush.msra.mxu0 0.0
        %444 = vmatpush.msra.mxu0 0.0
        %445 = vmatpush.msra.mxu0 0.0
        %446 = vmatpush.msra.mxu0 0.0
        %447 = vmatpush.msra.mxu0 0.0
        %448 = vmatpush.msra.mxu0 0.0
        %449 = vmatpush.msra.mxu0 0.0
        %450 = vmatpush.msra.mxu0 0.0
        %451 = vmatpush.msra.mxu0 0.0
        %452 = vmatpush.msra.mxu0 %v331
        %453 = vmatpush.msra.mxu0 %v330
        %454 = vmatpush.msra.mxu0 %v329
        %455 = vmatpush.msra.mxu0 %v328
        %456 = vmatmul.f32.gmra.mxu0 %v378
        %v457 = vpop.f32.mrf.mxu0
        %v458 = vadd.f32 %v360, %v457
        %459 = vdwg.mxu0
        %461 = vrot.lane.b32.xlu0 %v398, 120
        %v462 = vpop.permute.xlu0 %461
        %vm463 = vcmask 64512
        %v464 = vsel %vm463, %v398, 0
        %v466 = vsel %vm463, %v462, 0
        %468 = vmatpush.xpose.msra.mxu0 0.0
        %469 = vmatpush.xpose.msra.mxu0 0.0
        %470 = vmatpush.xpose.msra.mxu0 0.0
        %471 = vmatpush.xpose.msra.mxu0 0.0
        %472 = vmatpush.xpose.msra.mxu0 0.0
        %473 = vmatpush.xpose.msra.mxu0 0.0
        %474 = vmatpush.xpose.msra.mxu0 0.0
        %475 = vmatpush.xpose.msra.mxu0 0.0
        %476 = vmatpush.xpose.msra.mxu0 0.0
        %477 = vmatpush.xpose.msra.mxu0 0.0
        %478 = vmatpush.xpose.msra.mxu0 0.0
        %479 = vmatpush.xpose.msra.mxu0 0.0
        %480 = vmatpush.xpose.msra.mxu0 0.0
        %481 = vmatpush.xpose.msra.mxu0 0.0
        %482 = vmatpush.xpose.msra.mxu0 0.0
        %483 = vmatpush.xpose.msra.mxu0 %v466
        %484 = vmatmul.f32.gmra.mxu0 %v464
        %v485 = vpop.f32.mrf.mxu0
        %v486 = vadd.f32 0.0, %v485
        %487 = vdwg.mxu0
        %489 = vrot.lane.b32.xlu0 %v418, 120
        %v490 = vpop.permute.xlu0 %489
        %v491 = vsel %vm463, %v418, 0
        %v493 = vsel %vm463, %v490, 0
        %495 = vmatpush.xpose.msra.mxu0 0.0
        %496 = vmatpush.xpose.msra.mxu0 0.0
        %497 = vmatpush.xpose.msra.mxu0 0.0
        %498 = vmatpush.xpose.msra.mxu0 0.0
        %499 = vmatpush.xpose.msra.mxu0 0.0
        %500 = vmatpush.xpose.msra.mxu0 0.0
        %501 = vmatpush.xpose.msra.mxu0 0.0
        %502 = vmatpush.xpose.msra.mxu0 0.0
        %503 = vmatpush.xpose.msra.mxu0 0.0
        %504 = vmatpush.xpose.msra.mxu0 0.0
        %505 = vmatpush.xpose.msra.mxu0 0.0
        %506 = vmatpush.xpose.msra.mxu0 0.0
        %507 = vmatpush.xpose.msra.mxu0 0.0
        %508 = vmatpush.xpose.msra.mxu0 0.0
        %509 = vmatpush.xpose.msra.mxu0 0.0
        %510 = vmatpush.xpose.msra.mxu0 %v493
        %511 = vmatmul.f32.gmra.mxu0 %v491
        %v512 = vpop.f32.mrf.mxu0
        %v513 = vadd.f32 0.0, %v512
        %514 = vdwg.mxu0
        %516 = vrot.lane.b32.xlu0 %v438, 120
        %v517 = vpop.permute.xlu0 %516
        %v518 = vsel %vm463, %v438, 0
        %v520 = vsel %vm463, %v517, 0
        %522 = vmatpush.xpose.msra.mxu0 0.0
        %523 = vmatpush.xpose.msra.mxu0 0.0
        %524 = vmatpush.xpose.msra.mxu0 0.0
        %525 = vmatpush.xpose.msra.mxu0 0.0
        %526 = vmatpush.xpose.msra.mxu0 0.0
        %527 = vmatpush.xpose.msra.mxu0 0.0
        %528 = vmatpush.xpose.msra.mxu0 0.0
        %529 = vmatpush.xpose.msra.mxu0 0.0
        %530 = vmatpush.xpose.msra.mxu0 0.0
        %531 = vmatpush.xpose.msra.mxu0 0.0
        %532 = vmatpush.xpose.msra.mxu0 0.0
        %533 = vmatpush.xpose.msra.mxu0 0.0
        %534 = vmatpush.xpose.msra.mxu0 0.0
        %535 = vmatpush.xpose.msra.mxu0 0.0
        %536 = vmatpush.xpose.msra.mxu0 0.0
        %537 = vmatpush.xpose.msra.mxu0 %v520
        %538 = vmatmul.f32.gmra.mxu0 %v518
        %v539 = vpop.f32.mrf.mxu0
        %v540 = vadd.f32 0.0, %v539
        %541 = vdwg.mxu0
        %543 = vrot.lane.b32.xlu0 %v458, 120
        %v544 = vpop.permute.xlu0 %543
        %v545 = vsel %vm463, %v458, 0
        %v547 = vsel %vm463, %v544, 0
        %549 = vmatpush.xpose.msra.mxu0 0.0
        %550 = vmatpush.xpose.msra.mxu0 0.0
        %551 = vmatpush.xpose.msra.mxu0 0.0
        %552 = vmatpush.xpose.msra.mxu0 0.0
        %553 = vmatpush.xpose.msra.mxu0 0.0
        %554 = vmatpush.xpose.msra.mxu0 0.0
        %555 = vmatpush.xpose.msra.mxu0 0.0
        %556 = vmatpush.xpose.msra.mxu0 0.0
        %557 = vmatpush.xpose.msra.mxu0 0.0
        %558 = vmatpush.xpose.msra.mxu0 0.0
        %559 = vmatpush.xpose.msra.mxu0 0.0
        %560 = vmatpush.xpose.msra.mxu0 0.0
        %561 = vmatpush.xpose.msra.mxu0 0.0
        %562 = vmatpush.xpose.msra.mxu0 0.0
        %563 = vmatpush.xpose.msra.mxu0 0.0
        %564 = vmatpush.xpose.msra.mxu0 %v547
        %565 = vmatmul.f32.gmra.mxu0 %v545
        %v566 = vpop.f32.mrf.mxu0
        %v567 = vadd.f32 0.0, %v566
        %568 = vdwg.mxu0
        %v569 = vmul.f32 %v486, 0.35355338
        %v570 = vmul.f32 %v513, 0.35355338
        %v571 = vmul.f32 %v540, 0.35355338
        %v572 = vmul.f32 %v567, 0.35355338
        %v573 = vadd.f32 %v569, %v374
        %v574 = vadd.f32 %v570, %v374
        %v575 = vadd.f32 %v571, %v374
        %v576 = vadd.f32 %v572, %v374
        %v577 = vsel %vm463, %v573, -inf
        %578 = vmax.xlane.f32.xlu0 %v577
        %v579 = vpop.xlane.xlu0 %578
        %v580 = vsel %vm463, %v574, -inf
        %581 = vmax.xlane.f32.xlu0 %v580
        %v582 = vpop.xlane.xlu0 %581
        %v583 = vsel %vm463, %v575, -inf
        %584 = vmax.xlane.f32.xlu0 %v583
        %v585 = vpop.xlane.xlu0 %584
        %v586 = vsel %vm463, %v576, -inf
        %587 = vmax.xlane.f32.xlu0 %v586
        %v588 = vpop.xlane.xlu0 %587
        %v589 = vsub.f32 %v573, %v579
        %v590 = vsub.f32 %v574, %v582
        %v591 = vsub.f32 %v575, %v585
        %v592 = vsub.f32 %v576, %v588
        %v593 = vmul.f32 %v589, 1.442695
        %v594 = vpow.pop %v593
        %v595 = vmul.f32 %v590, 1.442695
        %v596 = vpow.pop %v595
        %v597 = vmul.f32 %v591, 1.442695
        %v598 = vpow.pop %v597
        %v599 = vmul.f32 %v592, 1.442695
        %v600 = vpow.pop %v599
        %v601 = vsel %vm463, %v594, 0.0
        %602 = vadd.xlane.f32.xlu0 %v601
        %v603 = vpop.xlane.xlu0 %602
        %v604 = vsel %vm463, %v596, 0.0
        %605 = vadd.xlane.f32.xlu0 %v604
        %v606 = vpop.xlane.xlu0 %605
        %v607 = vsel %vm463, %v598, 0.0
        %608 = vadd.xlane.f32.xlu0 %v607
        %v609 = vpop.xlane.xlu0 %608
        %v610 = vsel %vm463, %v600, 0.0
        %611 = vadd.xlane.f32.xlu0 %v610
        %v612 = vpop.xlane.xlu0 %611
        %v613 = vrcp.pop %v603
        %v614 = vmul.f32 %v603, %v613
        %v615 = vsub.f32 1.0, %v614
        %v616 = vmul.f32 %v613, %v615
        %v617 = vadd.f32 %v613, %v616
        %vm618 = vweird.f32 %v603
        %vm619 = vweird.f32 %v613
        %vm620 = vmor %vm618, %vm619
        %v621 = vsel %vm620, %v613, %v617
        %v622 = vand.u32 2147483647, %v603
        %vm623 = vcmp.eq.f32.partialorder %v622, 8.507059e+37
        %v624 = vand.u32 %v603, 2147483648
        %v625 = vor.u32 1.1754944e-38, %v624
        %v626 = vsel %vm623, %v625, %v621
        %v627 = vmul.f32 %v594, %v626
        %v628 = vrcp.pop %v606
        %v629 = vmul.f32 %v606, %v628
        %v630 = vsub.f32 1.0, %v629
        %v631 = vmul.f32 %v628, %v630
        %v632 = vadd.f32 %v628, %v631
        %vm633 = vweird.f32 %v606
        %vm634 = vweird.f32 %v628
        %vm635 = vmor %vm633, %vm634
        %v636 = vsel %vm635, %v628, %v632
        %v637 = vand.u32 2147483647, %v606
        %vm638 = vcmp.eq.f32.partialorder %v637, 8.507059e+37
        %v639 = vand.u32 %v606, 2147483648
        %v640 = vor.u32 1.1754944e-38, %v639
        %v641 = vsel %vm638, %v640, %v636
        %v642 = vmul.f32 %v596, %v641
        %v643 = vrcp.pop %v609
        %v644 = vmul.f32 %v609, %v643
        %v645 = vsub.f32 1.0, %v644
        %v646 = vmul.f32 %v643, %v645
        %v647 = vadd.f32 %v643, %v646
        %vm648 = vweird.f32 %v609
        %vm649 = vweird.f32 %v643
        %vm650 = vmor %vm648, %vm649
        %v651 = vsel %vm650, %v643, %v647
        %v652 = vand.u32 2147483647, %v609
        %vm653 = vcmp.eq.f32.partialorder %v652, 8.507059e+37
        %v654 = vand.u32 %v609, 2147483648
        %v655 = vor.u32 1.1754944e-38, %v654
        %v656 = vsel %vm653, %v655, %v651
        %v657 = vmul.f32 %v598, %v656
        %v658 = vrcp.pop %v612
        %v659 = vmul.f32 %v612, %v658
        %v660 = vsub.f32 1.0, %v659
        %v661 = vmul.f32 %v658, %v660
        %v662 = vadd.f32 %v658, %v661
        %vm663 = vweird.f32 %v612
        %vm664 = vweird.f32 %v658
        %vm665 = vmor %vm663, %vm664
        %v666 = vsel %vm665, %v658, %v662
        %v667 = vand.u32 2147483647, %v612
        %vm668 = vcmp.eq.f32.partialorder %v667, 8.507059e+37
        %v669 = vand.u32 %v612, 2147483648
        %v670 = vor.u32 1.1754944e-38, %v669
        %v671 = vsel %vm668, %v670, %v666
        %v672 = vmul.f32 %v600, %v671
        %673 = vrot.lane.b32.xlu0 %v398, 112
        %v674 = vpop.permute.xlu0 %673
        %v677 = vsel %vm463, %v627, 0
        %679 = vmatpush.msra.mxu0 0.0
        %680 = vmatpush.msra.mxu0 0.0
        %681 = vmatpush.msra.mxu0 0.0
        %682 = vmatpush.msra.mxu0 0.0
        %683 = vmatpush.msra.mxu0 0.0
        %684 = vmatpush.msra.mxu0 0.0
        %685 = vmatpush.msra.mxu0 0.0
        %686 = vmatpush.msra.mxu0 0.0
        %687 = vmatpush.msra.mxu0 0.0
        %688 = vmatpush.msra.mxu0 0.0
        %689 = vmatpush.msra.mxu0 0.0
        %690 = vmatpush.msra.mxu0 0.0
        %691 = vmatpush.msra.mxu0 0.0
        %692 = vmatpush.msra.mxu0 0.0
        %693 = vmatpush.msra.mxu0 0.0
        %694 = vmatpush.msra.mxu0 %v674
        %695 = vmatmul.f32.gmra.mxu0 %v677
        %v696 = vpop.f32.mrf.mxu0
        %v697 = vadd.f32 0.0, %v696
        %698 = vdwg.mxu0
        %699 = vrot.lane.b32.xlu0 %v418, 112
        %v700 = vpop.permute.xlu0 %699
        %v703 = vsel %vm463, %v642, 0
        %705 = vmatpush.msra.mxu0 0.0
        %706 = vmatpush.msra.mxu0 0.0
        %707 = vmatpush.msra.mxu0 0.0
        %708 = vmatpush.msra.mxu0 0.0
        %709 = vmatpush.msra.mxu0 0.0
        %710 = vmatpush.msra.mxu0 0.0
        %711 = vmatpush.msra.mxu0 0.0
        %712 = vmatpush.msra.mxu0 0.0
        %713 = vmatpush.msra.mxu0 0.0
        %714 = vmatpush.msra.mxu0 0.0
        %715 = vmatpush.msra.mxu0 0.0
        %716 = vmatpush.msra.mxu0 0.0
        %717 = vmatpush.msra.mxu0 0.0
        %718 = vmatpush.msra.mxu0 0.0
        %719 = vmatpush.msra.mxu0 0.0
        %720 = vmatpush.msra.mxu0 %v700
        %721 = vmatmul.f32.gmra.mxu0 %v703
        %v722 = vpop.f32.mrf.mxu0
        %v723 = vadd.f32 0.0, %v722
        %724 = vdwg.mxu0
        %725 = vrot.lane.b32.xlu0 %v438, 112
        %v726 = vpop.permute.xlu0 %725
        %v729 = vsel %vm463, %v657, 0
        %731 = vmatpush.msra.mxu0 0.0
        %732 = vmatpush.msra.mxu0 0.0
        %733 = vmatpush.msra.mxu0 0.0
        %734 = vmatpush.msra.mxu0 0.0
        %735 = vmatpush.msra.mxu0 0.0
        %736 = vmatpush.msra.mxu0 0.0
        %737 = vmatpush.msra.mxu0 0.0
        %738 = vmatpush.msra.mxu0 0.0
        %739 = vmatpush.msra.mxu0 0.0
        %740 = vmatpush.msra.mxu0 0.0
        %741 = vmatpush.msra.mxu0 0.0
        %742 = vmatpush.msra.mxu0 0.0
        %743 = vmatpush.msra.mxu0 0.0
        %744 = vmatpush.msra.mxu0 0.0
        %745 = vmatpush.msra.mxu0 0.0
        %746 = vmatpush.msra.mxu0 %v726
        %747 = vmatmul.f32.gmra.mxu0 %v729
        %v748 = vpop.f32.mrf.mxu0
        %v749 = vadd.f32 0.0, %v748
        %750 = vdwg.mxu0
        %751 = vrot.lane.b32.xlu0 %v458, 112
        %v752 = vpop.permute.xlu0 %751
        %v755 = vsel %vm463, %v672, 0
        %757 = vmatpush.msra.mxu0 0.0
        %758 = vmatpush.msra.mxu0 0.0
        %759 = vmatpush.msra.mxu0 0.0
        %760 = vmatpush.msra.mxu0 0.0
        %761 = vmatpush.msra.mxu0 0.0
        %762 = vmatpush.msra.mxu0 0.0
        %763 = vmatpush.msra.mxu0 0.0
        %764 = vmatpush.msra.mxu0 0.0
        %765 = vmatpush.msra.mxu0 0.0
        %766 = vmatpush.msra.mxu0 0.0
        %767 = vmatpush.msra.mxu0 0.0
        %768 = vmatpush.msra.mxu0 0.0
        %769 = vmatpush.msra.mxu0 0.0
        %770 = vmatpush.msra.mxu0 0.0
        %771 = vmatpush.msra.mxu0 0.0
        %772 = vmatpush.msra.mxu0 %v752
        %773 = vmatmul.f32.gmra.mxu0 %v755
        %v774 = vpop.f32.mrf.mxu0
        %v775 = vadd.f32 0.0, %v774
        %776 = vdwg.mxu0
        %v778 = vsel %vm463, %v697, 0
        %780 = vmatpush.msra.mxu0 0.0
        %781 = vmatpush.msra.mxu0 0.0
        %782 = vmatpush.msra.mxu0 0.0
        %783 = vmatpush.msra.mxu0 0.0
        %784 = vmatpush.msra.mxu0 0.0
        %785 = vmatpush.msra.mxu0 0.0
        %786 = vmatpush.msra.mxu0 0.0
        %787 = vmatpush.msra.mxu0 0.0
        %788 = vmatpush.msra.mxu0 0.0
        %789 = vmatpush.msra.mxu0 0.0
        %790 = vmatpush.msra.mxu0 0.0
        %791 = vmatpush.msra.mxu0 0.0
        %792 = vmatpush.msra.mxu0 0.0
        %793 = vmatpush.msra.mxu0 0.0
        %794 = vmatpush.msra.mxu0 0.0
        %795 = vmatpush.msra.mxu0 %v332
        %796 = vmatmul.f32.gmra.mxu0 %v778
        %v797 = vpop.f32.mrf.mxu0
        %v798 = vadd.f32 0.0, %v797
        %799 = vdwg.mxu0
        %v801 = vsel %vm463, %v723, 0
        %803 = vmatpush.msra.mxu0 0.0
        %804 = vmatpush.msra.mxu0 0.0
        %805 = vmatpush.msra.mxu0 0.0
        %806 = vmatpush.msra.mxu0 0.0
        %807 = vmatpush.msra.mxu0 0.0
        %808 = vmatpush.msra.mxu0 0.0
        %809 = vmatpush.msra.mxu0 0.0
        %810 = vmatpush.msra.mxu0 0.0
        %811 = vmatpush.msra.mxu0 0.0
        %812 = vmatpush.msra.mxu0 0.0
        %813 = vmatpush.msra.mxu0 0.0
        %814 = vmatpush.msra.mxu0 0.0
        %815 = vmatpush.msra.mxu0 0.0
        %816 = vmatpush.msra.mxu0 0.0
        %817 = vmatpush.msra.mxu0 0.0
        %818 = vmatpush.msra.mxu0 %v333
        %819 = vmatmul.f32.gmra.mxu0 %v801
        %v820 = vpop.f32.mrf.mxu0
        %v821 = vadd.f32 0.0, %v820
        %822 = vdwg.mxu0
        %v824 = vsel %vm463, %v749, 0
        %826 = vmatpush.msra.mxu0 0.0
        %827 = vmatpush.msra.mxu0 0.0
        %828 = vmatpush.msra.mxu0 0.0
        %829 = vmatpush.msra.mxu0 0.0
        %830 = vmatpush.msra.mxu0 0.0
        %831 = vmatpush.msra.mxu0 0.0
        %832 = vmatpush.msra.mxu0 0.0
        %833 = vmatpush.msra.mxu0 0.0
        %834 = vmatpush.msra.mxu0 0.0
        %835 = vmatpush.msra.mxu0 0.0
        %836 = vmatpush.msra.mxu0 0.0
        %837 = vmatpush.msra.mxu0 0.0
        %838 = vmatpush.msra.mxu0 0.0
        %839 = vmatpush.msra.mxu0 0.0
        %840 = vmatpush.msra.mxu0 0.0
        %841 = vmatpush.msra.mxu0 %v334
        %842 = vmatmul.f32.gmra.mxu0 %v824
        %v843 = vpop.f32.mrf.mxu0
        %v844 = vadd.f32 0.0, %v843
        %845 = vdwg.mxu0
        %v847 = vsel %vm463, %v775, 0
        %849 = vmatpush.msra.mxu0 0.0
        %850 = vmatpush.msra.mxu0 0.0
        %851 = vmatpush.msra.mxu0 0.0
        %852 = vmatpush.msra.mxu0 0.0
        %853 = vmatpush.msra.mxu0 0.0
        %854 = vmatpush.msra.mxu0 0.0
        %855 = vmatpush.msra.mxu0 0.0
        %856 = vmatpush.msra.mxu0 0.0
        %857 = vmatpush.msra.mxu0 0.0
        %858 = vmatpush.msra.mxu0 0.0
        %859 = vmatpush.msra.mxu0 0.0
        %860 = vmatpush.msra.mxu0 0.0
        %861 = vmatpush.msra.mxu0 0.0
        %862 = vmatpush.msra.mxu0 0.0
        %863 = vmatpush.msra.mxu0 0.0
        %864 = vmatpush.msra.mxu0 %v335
        %865 = vmatmul.f32.gmra.mxu0 %v847
        %v866 = vpop.f32.mrf.mxu0
        %v867 = vadd.f32 0.0, %v866
        %868 = vdwg.mxu0
        %v869 = vsel %vm376, %v798, 0.0
        %v870 = vsel %vm376, %v821, 0.0
        %v871 = vadd.f32 %v869, %v870
        %v872 = vsel %vm376, %v844, 0.0
        %v873 = vadd.f32 %v871, %v872
        %v874 = vsel %vm376, %v867, 0.0
        %v875 = vadd.f32 %v873, %v874
        %v876 = vadd.f32 %v875, %v365
        %v877 = vadd.f32 %v876, %v315
        %v878 = vsel %vm376, %v877, 0.0
        %879 = vadd.xlane.f32.xlu0 %v878
        %v880 = vpop.xlane.xlu0 %879
        %v881 = vrcp.pop 32.0
        %v882 = vmul.f32 32.0, %v881
        %v883 = vsub.f32 1.0, %v882
        %v884 = vmul.f32 %v881, %v883
        %v885 = vadd.f32 %v881, %v884
        %vm886 = vweird.f32 %v881
        %v887 = vsel %vm886, %v881, %v885
        %v888 = vmul.f32 %v880, %v887
        %v889 = vsub.f32 %v877, %v888
        %v890 = vmul.f32 %v889, %v889
        %v891 = vsel %vm376, %v890, 0.0
        %892 = vadd.xlane.f32.xlu0 %v891
        %v893 = vpop.xlane.xlu0 %892
        %v894 = vmul.f32 %v893, %v887
        %v895 = vadd.f32 %v894, 1e-12
        %v896 = vrsqrt.pop %v895
        %v897 = vmul.f32 %v896, %v895
        %v898 = vmul.f32 %v897, %v896
        %v899 = vmul.f32 0.5, %v898
        %v900 = vsub.f32 1.5, %v899
        %v901 = vmul.f32 %v896, %v900
        %vm902 = vweird.f32 %v895
        %vm903 = vweird.f32 %v896
        %vm904 = vmor %vm902, %vm903
        %v905 = vsel %vm904, %v896, %v901
        %v906 = vmul.f32 %v889, %v905
        %v907 = vmul.f32 %v366, %v906
        %v908 = vadd.f32 %v907, %v367
        %v910 = vsel %vm376, %v908, 0
        %912 = vmatpush.msra.mxu0 0.0
        %913 = vmatpush.msra.mxu0 0.0
        %914 = vmatpush.msra.mxu0 0.0
        %915 = vmatpush.msra.mxu0 0.0
        %916 = vmatpush.msra.mxu0 0.0
        %917 = vmatpush.msra.mxu0 0.0
        %918 = vmatpush.msra.mxu0 0.0
        %919 = vmatpush.msra.mxu0 0.0
        %920 = vmatpush.msra.mxu0 0.0
        %921 = vmatpush.msra.mxu0 0.0
        %922 = vmatpush.msra.mxu0 0.0
        %923 = vmatpush.msra.mxu0 0.0
        %924 = vmatpush.msra.mxu0 %v339
        %925 = vmatpush.msra.mxu0 %v338
        %926 = vmatpush.msra.mxu0 %v337
        %927 = vmatpush.msra.mxu0 %v336
        %928 = vmatmul.f32.gmra.mxu0 %v910
        %v929 = vpop.f32.mrf.mxu0
        %v930 = vadd.f32 %v371, %v929
        %931 = vdwg.mxu0
        %v932 = vmul.f32 %v930, 0.5
        %v933 = vmul.f32 %v930, 0.70710677
        %v934 = vmul.f32 %v933, %v933
        %v935 = vmin.f32 16.0, %v934
        %v936 = vmul.f32 %v935, 2.1237322e-06
        %v937 = vadd.f32 %v936, 0.00028619796
        %v938 = vmul.f32 %v935, %v937
        %v939 = vadd.f32 %v938, 0.0036580483
        %v940 = vmul.f32 %v935, %v939
        %v941 = vadd.f32 %v940, 0.05243302
        %v942 = vmul.f32 %v935, %v941
        %v943 = vadd.f32 %v942, 0.18741608
        %v944 = vmul.f32 %v935, %v943
        %v945 = vadd.f32 %v944, 1.1283791
        %v946 = vmul.f32 %v933, %v945
        %v947 = vmul.f32 %v935, 3.8918573e-05
        %v948 = vadd.f32 %v947, 0.001143296
        %v949 = vmul.f32 %v935, %v948
        %v950 = vadd.f32 %v949, 0.014752088
        %v951 = vmul.f32 %v935, %v950
        %v952 = vadd.f32 %v951, 0.112945676
        %v953 = vmul.f32 %v935, %v952
        %v954 = vadd.f32 %v953, 0.4994258
        %v955 = vmul.f32 %v935, %v954
        %v956 = vadd.f32 %v955, 1.0
        %v957 = vrcp.pop %v956
        %v958 = vmul.f32 %v956, %v957
        %v959 = vsub.f32 1.0, %v958
        %v960 = vmul.f32 %v957, %v959
        %v961 = vadd.f32 %v957, %v960
        %vm962 = vweird.f32 %v956
        %vm963 = vweird.f32 %v957
        %vm964 = vmor %vm962, %vm963
        %v965 = vsel %vm964, %v957, %v961
        %v966 = vand.u32 2147483647, %v956
        %vm967 = vcmp.eq.f32.partialorder %v966, 8.507059e+37
        %v968 = vand.u32 %v956, 2147483648
        %v969 = vor.u32 1.1754944e-38, %v968
        %v970 = vsel %vm967, %v969, %v965
        %v971 = vmul.f32 %v946, %v970
        %v972 = vmin.f32 %v971, 1.0
        %v973 = vmax.f32 %v972, -1.0
        %v974 = vadd.f32 %v973, 1.0
        %v975 = vmul.f32 %v932, %v974
        %vm976 = vcmask 523264
        %v978 = vsel %vm976, %v975, 0
        %980 = vmatpush.msra.mxu0 0.0
        %981 = vmatpush.msra.mxu0 0.0
        %982 = vmatpush.msra.mxu0 0.0
        %983 = vmatpush.msra.mxu0 0.0
        %984 = vmatpush.msra.mxu0 0.0
        %985 = vmatpush.msra.mxu0 0.0
        %986 = vmatpush.msra.mxu0 0.0
        %987 = vmatpush.msra.mxu0 0.0
        %988 = vmatpush.msra.mxu0 %v347
        %989 = vmatpush.msra.mxu0 %v346
        %990 = vmatpush.msra.mxu0 %v345
        %991 = vmatpush.msra.mxu0 %v344
        %992 = vmatpush.msra.mxu0 %v343
        %993 = vmatpush.msra.mxu0 %v342
        %994 = vmatpush.msra.mxu0 %v341
        %995 = vmatpush.msra.mxu0 %v340
        %996 = vmatmul.f32.gmra.mxu0 %v978
        %v997 = vpop.f32.mrf.mxu0
        %v998 = vadd.f32 %v368, %v997
        %999 = vdwg.mxu0
        %v1000 = vadd.f32 %v998, %v908
        %v1001 = vsel %vm376, %v1000, 0.0
        %1002 = vadd.xlane.f32.xlu0 %v1001
        %v1003 = vpop.xlane.xlu0 %1002
        %v1004 = vmul.f32 %v1003, %v887
        %v1005 = vsub.f32 %v1000, %v1004
        %v1006 = vmul.f32 %v1005, %v1005
        %v1007 = vsel %vm376, %v1006, 0.0
        %1008 = vadd.xlane.f32.xlu0 %v1007
        %v1009 = vpop.xlane.xlu0 %1008
        %v1010 = vmul.f32 %v1009, %v887
        %v1011 = vadd.f32 %v1010, 1e-12
        %v1012 = vrsqrt.pop %v1011
        %v1013 = vmul.f32 %v1012, %v1011
        %v1014 = vmul.f32 %v1013, %v1012
        %v1015 = vmul.f32 0.5, %v1014
        %v1016 = vsub.f32 1.5, %v1015
        %v1017 = vmul.f32 %v1012, %v1016
        %vm1018 = vweird.f32 %v1011
        %vm1019 = vweird.f32 %v1012
        %vm1020 = vmor %vm1018, %vm1019
        %v1021 = vsel %vm1020, %v1012, %v1017
        %v1022 = vmul.f32 %v1005, %v1021
        %v1023 = vmul.f32 %v369, %v1022
        %v1024 = vadd.f32 %v1023, %v370
        %v1026 = vsel %vm376, %v1024, 0
        %1028 = vmatpush.msra.mxu0 0.0
        %1029 = vmatpush.msra.mxu0 0.0
        %1030 = vmatpush.msra.mxu0 0.0
        %1031 = vmatpush.msra.mxu0 0.0
        %1032 = vmatpush.msra.mxu0 0.0
        %1033 = vmatpush.msra.mxu0 0.0
        %1034 = vmatpush.msra.mxu0 0.0
        %1035 = vmatpush.msra.mxu0 0.0
        %1036 = vmatpush.msra.mxu0 0.0
        %1037 = vmatpush.msra.mxu0 0.0
        %1038 = vmatpush.msra.mxu0 0.0
        %1039 = vmatpush.msra.mxu0 0.0
        %1040 = vmatpush.msra.mxu0 %v319
        %1041 = vmatpush.msra.mxu0 %v318
        %1042 = vmatpush.msra.mxu0 %v317
        %1043 = vmatpush.msra.mxu0 %v316
        %1044 = vmatmul.f32.gmra.mxu0 %v1026
        %v1045 = vpop.f32.mrf.mxu0
        %v1046 = vadd.f32 %v357, %v1045
        %1047 = vdwg.mxu0
        %1048 = vmatpush.msra.mxu0 0.0
        %1049 = vmatpush.msra.mxu0 0.0
        %1050 = vmatpush.msra.mxu0 0.0
        %1051 = vmatpush.msra.mxu0 0.0
        %1052 = vmatpush.msra.mxu0 0.0
        %1053 = vmatpush.msra.mxu0 0.0
        %1054 = vmatpush.msra.mxu0 0.0
        %1055 = vmatpush.msra.mxu0 0.0
        %1056 = vmatpush.msra.mxu0 0.0
        %1057 = vmatpush.msra.mxu0 0.0
        %1058 = vmatpush.msra.mxu0 0.0
        %1059 = vmatpush.msra.mxu0 0.0
        %1060 = vmatpush.msra.mxu0 %v323
        %1061 = vmatpush.msra.mxu0 %v322
        %1062 = vmatpush.msra.mxu0 %v321
        %1063 = vmatpush.msra.mxu0 %v320
        %1064 = vmatmul.f32.gmra.mxu0 %v1026
        %v1065 = vpop.f32.mrf.mxu0
        %v1066 = vadd.f32 %v358, %v1065
        %1067 = vdwg.mxu0
        %1068 = vmatpush.msra.mxu0 0.0
        %1069 = vmatpush.msra.mxu0 0.0
        %1070 = vmatpush.msra.mxu0 0.0
        %1071 = vmatpush.msra.mxu0 0.0
        %1072 = vmatpush.msra.mxu0 0.0
        %1073 = vmatpush.msra.mxu0 0.0
        %1074 = vmatpush.msra.mxu0 0.0
        %1075 = vmatpush.msra.mxu0 0.0
        %1076 = vmatpush.msra.mxu0 0.0
        %1077 = vmatpush.msra.mxu0 0.0
        %1078 = vmatpush.msra.mxu0 0.0
        %1079 = vmatpush.msra.mxu0 0.0
        %1080 = vmatpush.msra.mxu0 %v327
        %1081 = vmatpush.msra.mxu0 %v326
        %1082 = vmatpush.msra.mxu0 %v325
        %1083 = vmatpush.msra.mxu0 %v324
        %1084 = vmatmul.f32.gmra.mxu0 %v1026
        %v1085 = vpop.f32.mrf.mxu0
        %v1086 = vadd.f32 %v359, %v1085
        %1087 = vdwg.mxu0
        %1088 = vmatpush.msra.mxu0 0.0
        %1089 = vmatpush.msra.mxu0 0.0
        %1090 = vmatpush.msra.mxu0 0.0
        %1091 = vmatpush.msra.mxu0 0.0
        %1092 = vmatpush.msra.mxu0 0.0
        %1093 = vmatpush.msra.mxu0 0.0
        %1094 = vmatpush.msra.mxu0 0.0
        %1095 = vmatpush.msra.mxu0 0.0
        %1096 = vmatpush.msra.mxu0 0.0
        %1097 = vmatpush.msra.mxu0 0.0
        %1098 = vmatpush.msra.mxu0 0.0
        %1099 = vmatpush.msra.mxu0 0.0
        %1100 = vmatpush.msra.mxu0 %v331
        %1101 = vmatpush.msra.mxu0 %v330
        %1102 = vmatpush.msra.mxu0 %v329
        %1103 = vmatpush.msra.mxu0 %v328
        %1104 = vmatmul.f32.gmra.mxu0 %v1026
        %v1105 = vpop.f32.mrf.mxu0
        %v1106 = vadd.f32 %v360, %v1105
        %1107 = vdwg.mxu0
        %1109 = vrot.lane.b32.xlu0 %v1046, 120
        %v1110 = vpop.permute.xlu0 %1109
        %v1111 = vsel %vm463, %v1046, 0
        %v1113 = vsel %vm463, %v1110, 0
        %1115 = vmatpush.xpose.msra.mxu0 0.0
        %1116 = vmatpush.xpose.msra.mxu0 0.0
        %1117 = vmatpush.xpose.msra.mxu0 0.0
        %1118 = vmatpush.xpose.msra.mxu0 0.0
        %1119 = vmatpush.xpose.msra.mxu0 0.0
        %1120 = vmatpush.xpose.msra.mxu0 0.0
        %1121 = vmatpush.xpose.msra.mxu0 0.0
        %1122 = vmatpush.xpose.msra.mxu0 0.0
        %1123 = vmatpush.xpose.msra.mxu0 0.0
        %1124 = vmatpush.xpose.msra.mxu0 0.0
        %1125 = vmatpush.xpose.msra.mxu0 0.0
        %1126 = vmatpush.xpose.msra.mxu0 0.0
        %1127 = vmatpush.xpose.msra.mxu0 0.0
        %1128 = vmatpush.xpose.msra.mxu0 0.0
        %1129 = vmatpush.xpose.msra.mxu0 0.0
        %1130 = vmatpush.xpose.msra.mxu0 %v1113
        %1131 = vmatmul.f32.gmra.mxu0 %v1111
        %v1132 = vpop.f32.mrf.mxu0
        %v1133 = vadd.f32 0.0, %v1132
        %1134 = vdwg.mxu0
        %1136 = vrot.lane.b32.xlu0 %v1066, 120
        %v1137 = vpop.permute.xlu0 %1136
        %v1138 = vsel %vm463, %v1066, 0
        %v1140 = vsel %vm463, %v1137, 0
        %1142 = vmatpush.xpose.msra.mxu0 0.0
        %1143 = vmatpush.xpose.msra.mxu0 0.0
        %1144 = vmatpush.xpose.msra.mxu0 0.0
        %1145 = vmatpush.xpose.msra.mxu0 0.0
        %1146 = vmatpush.xpose.msra.mxu0 0.0
        %1147 = vmatpush.xpose.msra.mxu0 0.0
        %1148 = vmatpush.xpose.msra.mxu0 0.0
        %1149 = vmatpush.xpose.msra.mxu0 0.0
        %1150 = vmatpush.xpose.msra.mxu0 0.0
        %1151 = vmatpush.xpose.msra.mxu0 0.0
        %1152 = vmatpush.xpose.msra.mxu0 0.0
        %1153 = vmatpush.xpose.msra.mxu0 0.0
        %1154 = vmatpush.xpose.msra.mxu0 0.0
        %1155 = vmatpush.xpose.msra.mxu0 0.0
        %1156 = vmatpush.xpose.msra.mxu0 0.0
        %1157 = vmatpush.xpose.msra.mxu0 %v1140
        %1158 = vmatmul.f32.gmra.mxu0 %v1138
        %v1159 = vpop.f32.mrf.mxu0
        %v1160 = vadd.f32 0.0, %v1159
        %1161 = vdwg.mxu0
        %1163 = vrot.lane.b32.xlu0 %v1086, 120
        %v1164 = vpop.permute.xlu0 %1163
        %v1165 = vsel %vm463, %v1086, 0
        %v1167 = vsel %vm463, %v1164, 0
        %1169 = vmatpush.xpose.msra.mxu0 0.0
        %1170 = vmatpush.xpose.msra.mxu0 0.0
        %1171 = vmatpush.xpose.msra.mxu0 0.0
        %1172 = vmatpush.xpose.msra.mxu0 0.0
        %1173 = vmatpush.xpose.msra.mxu0 0.0
        %1174 = vmatpush.xpose.msra.mxu0 0.0
        %1175 = vmatpush.xpose.msra.mxu0 0.0
        %1176 = vmatpush.xpose.msra.mxu0 0.0
        %1177 = vmatpush.xpose.msra.mxu0 0.0
        %1178 = vmatpush.xpose.msra.mxu0 0.0
        %1179 = vmatpush.xpose.msra.mxu0 0.0
        %1180 = vmatpush.xpose.msra.mxu0 0.0
        %1181 = vmatpush.xpose.msra.mxu0 0.0
        %1182 = vmatpush.xpose.msra.mxu0 0.0
        %1183 = vmatpush.xpose.msra.mxu0 0.0
        %1184 = vmatpush.xpose.msra.mxu0 %v1167
        %1185 = vmatmul.f32.gmra.mxu0 %v1165
        %v1186 = vpop.f32.mrf.mxu0
        %v1187 = vadd.f32 0.0, %v1186
        %1188 = vdwg.mxu0
        %1190 = vrot.lane.b32.xlu0 %v1106, 120
        %v1191 = vpop.permute.xlu0 %1190
        %v1192 = vsel %vm463, %v1106, 0
        %v1194 = vsel %vm463, %v1191, 0
        %1196 = vmatpush.xpose.msra.mxu0 0.0
        %1197 = vmatpush.xpose.msra.mxu0 0.0
        %1198 = vmatpush.xpose.msra.mxu0 0.0
        %1199 = vmatpush.xpose.msra.mxu0 0.0
        %1200 = vmatpush.xpose.msra.mxu0 0.0
        %1201 = vmatpush.xpose.msra.mxu0 0.0
        %1202 = vmatpush.xpose.msra.mxu0 0.0
        %1203 = vmatpush.xpose.msra.mxu0 0.0
        %1204 = vmatpush.xpose.msra.mxu0 0.0
        %1205 = vmatpush.xpose.msra.mxu0 0.0
        %1206 = vmatpush.xpose.msra.mxu0 0.0
        %1207 = vmatpush.xpose.msra.mxu0 0.0
        %1208 = vmatpush.xpose.msra.mxu0 0.0
        %1209 = vmatpush.xpose.msra.mxu0 0.0
        %1210 = vmatpush.xpose.msra.mxu0 0.0
        %1211 = vmatpush.xpose.msra.mxu0 %v1194
        %1212 = vmatmul.f32.gmra.mxu0 %v1192
        %v1213 = vpop.f32.mrf.mxu0
        %v1214 = vadd.f32 0.0, %v1213
        %1215 = vdwg.mxu0
        %v1216 = vmul.f32 %v1133, 0.35355338
        %v1217 = vmul.f32 %v1160, 0.35355338
        %v1218 = vmul.f32 %v1187, 0.35355338
        %v1219 = vmul.f32 %v1214, 0.35355338
        %v1220 = vadd.f32 %v1216, %v374
        %v1221 = vadd.f32 %v1217, %v374
        %v1222 = vadd.f32 %v1218, %v374
        %v1223 = vadd.f32 %v1219, %v374
        %v1224 = vsel %vm463, %v1220, -inf
        %1225 = vmax.xlane.f32.xlu0 %v1224
        %v1226 = vpop.xlane.xlu0 %1225
        %v1227 = vsel %vm463, %v1221, -inf
        %1228 = vmax.xlane.f32.xlu0 %v1227
        %v1229 = vpop.xlane.xlu0 %1228
        %v1230 = vsel %vm463, %v1222, -inf
        %1231 = vmax.xlane.f32.xlu0 %v1230
        %v1232 = vpop.xlane.xlu0 %1231
        %v1233 = vsel %vm463, %v1223, -inf
        %1234 = vmax.xlane.f32.xlu0 %v1233
        %v1235 = vpop.xlane.xlu0 %1234
        %v1236 = vsub.f32 %v1220, %v1226
        %v1237 = vsub.f32 %v1221, %v1229
        %v1238 = vsub.f32 %v1222, %v1232
        %v1239 = vsub.f32 %v1223, %v1235
        %v1240 = vmul.f32 %v1236, 1.442695
        %v1241 = vpow.pop %v1240
        %v1242 = vmul.f32 %v1237, 1.442695
        %v1243 = vpow.pop %v1242
        %v1244 = vmul.f32 %v1238, 1.442695
        %v1245 = vpow.pop %v1244
        %v1246 = vmul.f32 %v1239, 1.442695
        %v1247 = vpow.pop %v1246
        %v1248 = vsel %vm463, %v1241, 0.0
        %1249 = vadd.xlane.f32.xlu0 %v1248
        %v1250 = vpop.xlane.xlu0 %1249
        %v1251 = vsel %vm463, %v1243, 0.0
        %1252 = vadd.xlane.f32.xlu0 %v1251
        %v1253 = vpop.xlane.xlu0 %1252
        %v1254 = vsel %vm463, %v1245, 0.0
        %1255 = vadd.xlane.f32.xlu0 %v1254
        %v1256 = vpop.xlane.xlu0 %1255
        %v1257 = vsel %vm463, %v1247, 0.0
        %1258 = vadd.xlane.f32.xlu0 %v1257
        %v1259 = vpop.xlane.xlu0 %1258
        %v1260 = vrcp.pop %v1250
        %v1261 = vmul.f32 %v1250, %v1260
        %v1262 = vsub.f32 1.0, %v1261
        %v1263 = vmul.f32 %v1260, %v1262
        %v1264 = vadd.f32 %v1260, %v1263
        %vm1265 = vweird.f32 %v1250
        %vm1266 = vweird.f32 %v1260
        %vm1267 = vmor %vm1265, %vm1266
        %v1268 = vsel %vm1267, %v1260, %v1264
        %v1269 = vand.u32 2147483647, %v1250
        %vm1270 = vcmp.eq.f32.partialorder %v1269, 8.507059e+37
        %v1271 = vand.u32 %v1250, 2147483648
        %v1272 = vor.u32 1.1754944e-38, %v1271
        %v1273 = vsel %vm1270, %v1272, %v1268
        %v1274 = vmul.f32 %v1241, %v1273
        %v1275 = vrcp.pop %v1253
        %v1276 = vmul.f32 %v1253, %v1275
        %v1277 = vsub.f32 1.0, %v1276
        %v1278 = vmul.f32 %v1275, %v1277
        %v1279 = vadd.f32 %v1275, %v1278
        %vm1280 = vweird.f32 %v1253
        %vm1281 = vweird.f32 %v1275
        %vm1282 = vmor %vm1280, %vm1281
        %v1283 = vsel %vm1282, %v1275, %v1279
        %v1284 = vand.u32 2147483647, %v1253
        %vm1285 = vcmp.eq.f32.partialorder %v1284, 8.507059e+37
        %v1286 = vand.u32 %v1253, 2147483648
        %v1287 = vor.u32 1.1754944e-38, %v1286
        %v1288 = vsel %vm1285, %v1287, %v1283
        %v1289 = vmul.f32 %v1243, %v1288
        %v1290 = vrcp.pop %v1256
        %v1291 = vmul.f32 %v1256, %v1290
        %v1292 = vsub.f32 1.0, %v1291
        %v1293 = vmul.f32 %v1290, %v1292
        %v1294 = vadd.f32 %v1290, %v1293
        %vm1295 = vweird.f32 %v1256
        %vm1296 = vweird.f32 %v1290
        %vm1297 = vmor %vm1295, %vm1296
        %v1298 = vsel %vm1297, %v1290, %v1294
        %v1299 = vand.u32 2147483647, %v1256
        %vm1300 = vcmp.eq.f32.partialorder %v1299, 8.507059e+37
        %v1301 = vand.u32 %v1256, 2147483648
        %v1302 = vor.u32 1.1754944e-38, %v1301
        %v1303 = vsel %vm1300, %v1302, %v1298
        %v1304 = vmul.f32 %v1245, %v1303
        %v1305 = vrcp.pop %v1259
        %v1306 = vmul.f32 %v1259, %v1305
        %v1307 = vsub.f32 1.0, %v1306
        %v1308 = vmul.f32 %v1305, %v1307
        %v1309 = vadd.f32 %v1305, %v1308
        %vm1310 = vweird.f32 %v1259
        %vm1311 = vweird.f32 %v1305
        %vm1312 = vmor %vm1310, %vm1311
        %v1313 = vsel %vm1312, %v1305, %v1309
        %v1314 = vand.u32 2147483647, %v1259
        %vm1315 = vcmp.eq.f32.partialorder %v1314, 8.507059e+37
        %v1316 = vand.u32 %v1259, 2147483648
        %v1317 = vor.u32 1.1754944e-38, %v1316
        %v1318 = vsel %vm1315, %v1317, %v1313
        %v1319 = vmul.f32 %v1247, %v1318
        %1320 = vrot.lane.b32.xlu0 %v1046, 112
        %v1321 = vpop.permute.xlu0 %1320
        %v1324 = vsel %vm463, %v1274, 0
        %1326 = vmatpush.msra.mxu0 0.0
        %1327 = vmatpush.msra.mxu0 0.0
        %1328 = vmatpush.msra.mxu0 0.0
        %1329 = vmatpush.msra.mxu0 0.0
        %1330 = vmatpush.msra.mxu0 0.0
        %1331 = vmatpush.msra.mxu0 0.0
        %1332 = vmatpush.msra.mxu0 0.0
        %1333 = vmatpush.msra.mxu0 0.0
        %1334 = vmatpush.msra.mxu0 0.0
        %1335 = vmatpush.msra.mxu0 0.0
        %1336 = vmatpush.msra.mxu0 0.0
        %1337 = vmatpush.msra.mxu0 0.0
        %1338 = vmatpush.msra.mxu0 0.0
        %1339 = vmatpush.msra.mxu0 0.0
        %1340 = vmatpush.msra.mxu0 0.0
        %1341 = vmatpush.msra.mxu0 %v1321
        %1342 = vmatmul.f32.gmra.mxu0 %v1324
        %v1343 = vpop.f32.mrf.mxu0
        %v1344 = vadd.f32 0.0, %v1343
        %1345 = vdwg.mxu0
        %1346 = vrot.lane.b32.xlu0 %v1066, 112
        %v1347 = vpop.permute.xlu0 %1346
        %v1350 = vsel %vm463, %v1289, 0
        %1352 = vmatpush.msra.mxu0 0.0
        %1353 = vmatpush.msra.mxu0 0.0
        %1354 = vmatpush.msra.mxu0 0.0
        %1355 = vmatpush.msra.mxu0 0.0
        %1356 = vmatpush.msra.mxu0 0.0
        %1357 = vmatpush.msra.mxu0 0.0
        %1358 = vmatpush.msra.mxu0 0.0
        %1359 = vmatpush.msra.mxu0 0.0
        %1360 = vmatpush.msra.mxu0 0.0
        %1361 = vmatpush.msra.mxu0 0.0
        %1362 = vmatpush.msra.mxu0 0.0
        %1363 = vmatpush.msra.mxu0 0.0
        %1364 = vmatpush.msra.mxu0 0.0
        %1365 = vmatpush.msra.mxu0 0.0
        %1366 = vmatpush.msra.mxu0 0.0
        %1367 = vmatpush.msra.mxu0 %v1347
        %1368 = vmatmul.f32.gmra.mxu0 %v1350
        %v1369 = vpop.f32.mrf.mxu0
        %v1370 = vadd.f32 0.0, %v1369
        %1371 = vdwg.mxu0
        %1372 = vrot.lane.b32.xlu0 %v1086, 112
        %v1373 = vpop.permute.xlu0 %1372
        %v1376 = vsel %vm463, %v1304, 0
        %1378 = vmatpush.msra.mxu0 0.0
        %1379 = vmatpush.msra.mxu0 0.0
        %1380 = vmatpush.msra.mxu0 0.0
        %1381 = vmatpush.msra.mxu0 0.0
        %1382 = vmatpush.msra.mxu0 0.0
        %1383 = vmatpush.msra.mxu0 0.0
        %1384 = vmatpush.msra.mxu0 0.0
        %1385 = vmatpush.msra.mxu0 0.0
        %1386 = vmatpush.msra.mxu0 0.0
        %1387 = vmatpush.msra.mxu0 0.0
        %1388 = vmatpush.msra.mxu0 0.0
        %1389 = vmatpush.msra.mxu0 0.0
        %1390 = vmatpush.msra.mxu0 0.0
        %1391 = vmatpush.msra.mxu0 0.0
        %1392 = vmatpush.msra.mxu0 0.0
        %1393 = vmatpush.msra.mxu0 %v1373
        %1394 = vmatmul.f32.gmra.mxu0 %v1376
        %v1395 = vpop.f32.mrf.mxu0
        %v1396 = vadd.f32 0.0, %v1395
        %1397 = vdwg.mxu0
        %1398 = vrot.lane.b32.xlu0 %v1106, 112
        %v1399 = vpop.permute.xlu0 %1398
        %v1402 = vsel %vm463, %v1319, 0
        %1404 = vmatpush.msra.mxu0 0.0
        %1405 = vmatpush.msra.mxu0 0.0
        %1406 = vmatpush.msra.mxu0 0.0
        %1407 = vmatpush.msra.mxu0 0.0
        %1408 = vmatpush.msra.mxu0 0.0
        %1409 = vmatpush.msra.mxu0 0.0
        %1410 = vmatpush.msra.mxu0 0.0
        %1411 = vmatpush.msra.mxu0 0.0
        %1412 = vmatpush.msra.mxu0 0.0
        %1413 = vmatpush.msra.mxu0 0.0
        %1414 = vmatpush.msra.mxu0 0.0
        %1415 = vmatpush.msra.mxu0 0.0
        %1416 = vmatpush.msra.mxu0 0.0
        %1417 = vmatpush.msra.mxu0 0.0
        %1418 = vmatpush.msra.mxu0 0.0
        %1419 = vmatpush.msra.mxu0 %v1399
        %1420 = vmatmul.f32.gmra.mxu0 %v1402
        %v1421 = vpop.f32.mrf.mxu0
        %v1422 = vadd.f32 0.0, %v1421
        %1423 = vdwg.mxu0
        %v1425 = vsel %vm463, %v1344, 0
        %1427 = vmatpush.msra.mxu0 0.0
        %1428 = vmatpush.msra.mxu0 0.0
        %1429 = vmatpush.msra.mxu0 0.0
        %1430 = vmatpush.msra.mxu0 0.0
        %1431 = vmatpush.msra.mxu0 0.0
        %1432 = vmatpush.msra.mxu0 0.0
        %1433 = vmatpush.msra.mxu0 0.0
        %1434 = vmatpush.msra.mxu0 0.0
        %1435 = vmatpush.msra.mxu0 0.0
        %1436 = vmatpush.msra.mxu0 0.0
        %1437 = vmatpush.msra.mxu0 0.0
        %1438 = vmatpush.msra.mxu0 0.0
        %1439 = vmatpush.msra.mxu0 0.0
        %1440 = vmatpush.msra.mxu0 0.0
        %1441 = vmatpush.msra.mxu0 0.0
        %1442 = vmatpush.msra.mxu0 %v332
        %1443 = vmatmul.f32.gmra.mxu0 %v1425
        %v1444 = vpop.f32.mrf.mxu0
        %v1445 = vadd.f32 0.0, %v1444
        %1446 = vdwg.mxu0
        %v1448 = vsel %vm463, %v1370, 0
        %1450 = vmatpush.msra.mxu0 0.0
        %1451 = vmatpush.msra.mxu0 0.0
        %1452 = vmatpush.msra.mxu0 0.0
        %1453 = vmatpush.msra.mxu0 0.0
        %1454 = vmatpush.msra.mxu0 0.0
        %1455 = vmatpush.msra.mxu0 0.0
        %1456 = vmatpush.msra.mxu0 0.0
        %1457 = vmatpush.msra.mxu0 0.0
        %1458 = vmatpush.msra.mxu0 0.0
        %1459 = vmatpush.msra.mxu0 0.0
        %1460 = vmatpush.msra.mxu0 0.0
        %1461 = vmatpush.msra.mxu0 0.0
        %1462 = vmatpush.msra.mxu0 0.0
        %1463 = vmatpush.msra.mxu0 0.0
        %1464 = vmatpush.msra.mxu0 0.0
        %1465 = vmatpush.msra.mxu0 %v333
        %1466 = vmatmul.f32.gmra.mxu0 %v1448
        %v1467 = vpop.f32.mrf.mxu0
        %v1468 = vadd.f32 0.0, %v1467
        %1469 = vdwg.mxu0
        %v1471 = vsel %vm463, %v1396, 0
        %1473 = vmatpush.msra.mxu0 0.0
        %1474 = vmatpush.msra.mxu0 0.0
        %1475 = vmatpush.msra.mxu0 0.0
        %1476 = vmatpush.msra.mxu0 0.0
        %1477 = vmatpush.msra.mxu0 0.0
        %1478 = vmatpush.msra.mxu0 0.0
        %1479 = vmatpush.msra.mxu0 0.0
        %1480 = vmatpush.msra.mxu0 0.0
        %1481 = vmatpush.msra.mxu0 0.0
        %1482 = vmatpush.msra.mxu0 0.0
        %1483 = vmatpush.msra.mxu0 0.0
        %1484 = vmatpush.msra.mxu0 0.0
        %1485 = vmatpush.msra.mxu0 0.0
        %1486 = vmatpush.msra.mxu0 0.0
        %1487 = vmatpush.msra.mxu0 0.0
        %1488 = vmatpush.msra.mxu0 %v334
        %1489 = vmatmul.f32.gmra.mxu0 %v1471
        %v1490 = vpop.f32.mrf.mxu0
        %v1491 = vadd.f32 0.0, %v1490
        %1492 = vdwg.mxu0
        %v1494 = vsel %vm463, %v1422, 0
        %1496 = vmatpush.msra.mxu0 0.0
        %1497 = vmatpush.msra.mxu0 0.0
        %1498 = vmatpush.msra.mxu0 0.0
        %1499 = vmatpush.msra.mxu0 0.0
        %1500 = vmatpush.msra.mxu0 0.0
        %1501 = vmatpush.msra.mxu0 0.0
        %1502 = vmatpush.msra.mxu0 0.0
        %1503 = vmatpush.msra.mxu0 0.0
        %1504 = vmatpush.msra.mxu0 0.0
        %1505 = vmatpush.msra.mxu0 0.0
        %1506 = vmatpush.msra.mxu0 0.0
        %1507 = vmatpush.msra.mxu0 0.0
        %1508 = vmatpush.msra.mxu0 0.0
        %1509 = vmatpush.msra.mxu0 0.0
        %1510 = vmatpush.msra.mxu0 0.0
        %1511 = vmatpush.msra.mxu0 %v335
        %1512 = vmatmul.f32.gmra.mxu0 %v1494
        %v1513 = vpop.f32.mrf.mxu0
        %v1514 = vadd.f32 0.0, %v1513
        %1515 = vdwg.mxu0
        %v1516 = vsel %vm376, %v1445, 0.0
        %v1517 = vsel %vm376, %v1468, 0.0
        %v1518 = vadd.f32 %v1516, %v1517
        %v1519 = vsel %vm376, %v1491, 0.0
        %v1520 = vadd.f32 %v1518, %v1519
        %v1521 = vsel %vm376, %v1514, 0.0
        %v1522 = vadd.f32 %v1520, %v1521
        %v1523 = vadd.f32 %v1522, %v365
        %v1524 = vadd.f32 %v1523, %v1024
        %v1525 = vsel %vm376, %v1524, 0.0
        %1526 = vadd.xlane.f32.xlu0 %v1525
        %v1527 = vpop.xlane.xlu0 %1526
        %v1528 = vmul.f32 %v1527, %v887
        %v1529 = vsub.f32 %v1524, %v1528
        %v1530 = vmul.f32 %v1529, %v1529
        %v1531 = vsel %vm376, %v1530, 0.0
        %1532 = vadd.xlane.f32.xlu0 %v1531
        %v1533 = vpop.xlane.xlu0 %1532
        %v1534 = vmul.f32 %v1533, %v887
        %v1535 = vadd.f32 %v1534, 1e-12
        %v1536 = vrsqrt.pop %v1535
        %v1537 = vmul.f32 %v1536, %v1535
        %v1538 = vmul.f32 %v1537, %v1536
        %v1539 = vmul.f32 0.5, %v1538
        %v1540 = vsub.f32 1.5, %v1539
        %v1541 = vmul.f32 %v1536, %v1540
        %vm1542 = vweird.f32 %v1535
        %vm1543 = vweird.f32 %v1536
        %vm1544 = vmor %vm1542, %vm1543
        %v1545 = vsel %vm1544, %v1536, %v1541
        %v1546 = vmul.f32 %v1529, %v1545
        %v1547 = vmul.f32 %v366, %v1546
        %v1548 = vadd.f32 %v1547, %v367
        %v1550 = vsel %vm376, %v1548, 0
        %1552 = vmatpush.msra.mxu0 0.0
        %1553 = vmatpush.msra.mxu0 0.0
        %1554 = vmatpush.msra.mxu0 0.0
        %1555 = vmatpush.msra.mxu0 0.0
        %1556 = vmatpush.msra.mxu0 0.0
        %1557 = vmatpush.msra.mxu0 0.0
        %1558 = vmatpush.msra.mxu0 0.0
        %1559 = vmatpush.msra.mxu0 0.0
        %1560 = vmatpush.msra.mxu0 0.0
        %1561 = vmatpush.msra.mxu0 0.0
        %1562 = vmatpush.msra.mxu0 0.0
        %1563 = vmatpush.msra.mxu0 0.0
        %1564 = vmatpush.msra.mxu0 %v339
        %1565 = vmatpush.msra.mxu0 %v338
        %1566 = vmatpush.msra.mxu0 %v337
        %1567 = vmatpush.msra.mxu0 %v336
        %1568 = vmatmul.f32.gmra.mxu0 %v1550
        %v1569 = vpop.f32.mrf.mxu0
        %v1570 = vadd.f32 %v371, %v1569
        %1571 = vdwg.mxu0
        %v1572 = vmul.f32 %v1570, 0.5
        %v1573 = vmul.f32 %v1570, 0.70710677
        %v1574 = vmul.f32 %v1573, %v1573
        %v1575 = vmin.f32 16.0, %v1574
        %v1576 = vmul.f32 %v1575, 2.1237322e-06
        %v1577 = vadd.f32 %v1576, 0.00028619796
        %v1578 = vmul.f32 %v1575, %v1577
        %v1579 = vadd.f32 %v1578, 0.0036580483
        %v1580 = vmul.f32 %v1575, %v1579
        %v1581 = vadd.f32 %v1580, 0.05243302
        %v1582 = vmul.f32 %v1575, %v1581
        %v1583 = vadd.f32 %v1582, 0.18741608
        %v1584 = vmul.f32 %v1575, %v1583
        %v1585 = vadd.f32 %v1584, 1.1283791
        %v1586 = vmul.f32 %v1573, %v1585
        %v1587 = vmul.f32 %v1575, 3.8918573e-05
        %v1588 = vadd.f32 %v1587, 0.001143296
        %v1589 = vmul.f32 %v1575, %v1588
        %v1590 = vadd.f32 %v1589, 0.014752088
        %v1591 = vmul.f32 %v1575, %v1590
        %v1592 = vadd.f32 %v1591, 0.112945676
        %v1593 = vmul.f32 %v1575, %v1592
        %v1594 = vadd.f32 %v1593, 0.4994258
        %v1595 = vmul.f32 %v1575, %v1594
        %v1596 = vadd.f32 %v1595, 1.0
        %v1597 = vrcp.pop %v1596
        %v1598 = vmul.f32 %v1596, %v1597
        %v1599 = vsub.f32 1.0, %v1598
        %v1600 = vmul.f32 %v1597, %v1599
        %v1601 = vadd.f32 %v1597, %v1600
        %vm1602 = vweird.f32 %v1596
        %vm1603 = vweird.f32 %v1597
        %vm1604 = vmor %vm1602, %vm1603
        %v1605 = vsel %vm1604, %v1597, %v1601
        %v1606 = vand.u32 2147483647, %v1596
        %vm1607 = vcmp.eq.f32.partialorder %v1606, 8.507059e+37
        %v1608 = vand.u32 %v1596, 2147483648
        %v1609 = vor.u32 1.1754944e-38, %v1608
        %v1610 = vsel %vm1607, %v1609, %v1605
        %v1611 = vmul.f32 %v1586, %v1610
        %v1612 = vmin.f32 %v1611, 1.0
        %v1613 = vmax.f32 %v1612, -1.0
        %v1614 = vadd.f32 %v1613, 1.0
        %v1615 = vmul.f32 %v1572, %v1614
        %v1617 = vsel %vm976, %v1615, 0
        %1619 = vmatpush.msra.mxu0 0.0
        %1620 = vmatpush.msra.mxu0 0.0
        %1621 = vmatpush.msra.mxu0 0.0
        %1622 = vmatpush.msra.mxu0 0.0
        %1623 = vmatpush.msra.mxu0 0.0
        %1624 = vmatpush.msra.mxu0 0.0
        %1625 = vmatpush.msra.mxu0 0.0
        %1626 = vmatpush.msra.mxu0 0.0
        %1627 = vmatpush.msra.mxu0 %v347
        %1628 = vmatpush.msra.mxu0 %v346
        %1629 = vmatpush.msra.mxu0 %v345
        %1630 = vmatpush.msra.mxu0 %v344
        %1631 = vmatpush.msra.mxu0 %v343
        %1632 = vmatpush.msra.mxu0 %v342
        %1633 = vmatpush.msra.mxu0 %v341
        %1634 = vmatpush.msra.mxu0 %v340
        %1635 = vmatmul.f32.gmra.mxu0 %v1617
        %v1636 = vpop.f32.mrf.mxu0
        %v1637 = vadd.f32 %v368, %v1636
        %1638 = vdwg.mxu0
        %v1639 = vadd.f32 %v1637, %v1548
        %v1640 = vsel %vm376, %v1639, 0.0
        %1641 = vadd.xlane.f32.xlu0 %v1640
        %v1642 = vpop.xlane.xlu0 %1641
        %v1643 = vmul.f32 %v1642, %v887
        %v1644 = vsub.f32 %v1639, %v1643
        %v1645 = vmul.f32 %v1644, %v1644
        %v1646 = vsel %vm376, %v1645, 0.0
        %1647 = vadd.xlane.f32.xlu0 %v1646
        %v1648 = vpop.xlane.xlu0 %1647
        %v1649 = vmul.f32 %v1648, %v887
        %v1650 = vadd.f32 %v1649, 1e-12
        %v1651 = vrsqrt.pop %v1650
        %v1652 = vmul.f32 %v1651, %v1650
        %v1653 = vmul.f32 %v1652, %v1651
        %v1654 = vmul.f32 0.5, %v1653
        %v1655 = vsub.f32 1.5, %v1654
        %v1656 = vmul.f32 %v1651, %v1655
        %vm1657 = vweird.f32 %v1650
        %vm1658 = vweird.f32 %v1651
        %vm1659 = vmor %vm1657, %vm1658
        %v1660 = vsel %vm1659, %v1651, %v1656
        %v1661 = vmul.f32 %v1644, %v1660
        %v1662 = vmul.f32 %v369, %v1661
        %v1663 = vadd.f32 %v1662, %v370
        %1664 = vst.msk [vmem:[%s307] sm:$0xff] %vm376, %v1663
        %s1665 = sand.u32 %s208, 1
        %s1666 = scalar_lea.sflag [#allocation3], %s1665
        %s1667 = sand.u32 %s208, 1
        %s1668 = smul.addr %s1667, 8
        %s1669 = scalar_lea.vmem [#allocation2], %s1668
        // Predicated region
        $region53: #{tpu_custom_call.1} parent=51 // pred_check
          %p1670 = pneg %p218
        $region54: #{tpu_custom_call.1} parent=51 // pred_check_branch
          %1672 = sbr.rel (%p1670) target = $region56
        $region55: #{tpu_custom_call.1} parent=51 // pred_region
          %1674 = vsyncadd %s1666, 0
          %s1675 = smul.addr %s22, 8
          %s1676 = scalar_lea.hbm %s8, %s1675
          %s1678 = sshll.u32 %s1669, 4
          %s1679 = int_to_ptr.vmem [resolvable:$true] %s1678
          %s1680 = sshll.u32 %s1676, 4
          %s1681 = int_to_ptr.hbm [resolvable:$true] %s1680
          %1683 = dma.vmem_to_hbm [thread:$0]  %s1679, 128, %s1681, %s1666
        $region56: #{tpu_custom_call.1} parent=51 // pred_fallthru
          _
      $region52: #{tpu_custom_call.1} parent=5 // pred_fallthru
        _
      %p1684 = scmp.le.s32.totalorder 2, %s17
      // Predicated region
      $region57: #{tpu_custom_call.1} parent=5 // pred_check
        %p1685 = pneg %p1684
      $region58: #{tpu_custom_call.1} parent=5 // pred_check_branch
        %1687 = sbr.rel (%p1685) target = $region60
      $region59: #{tpu_custom_call.1} parent=5 // pred_region
        %s1688 = ssub.s32 %s17, 2
        // Predicated region
        $region61: #{tpu_custom_call.1} parent=59 // pred_check
          %p1689 = pneg %p224
        $region62: #{tpu_custom_call.1} parent=59 // pred_check_branch
          %1691 = sbr.rel (%p1689) target = $region64
        $region63: #{tpu_custom_call.1} parent=59 // pred_region
          %s1692 = sand.u32 %s209, 1
          %s1693 = scalar_lea.sflag [#allocation3], %s1692
          %s1694 = sand.u32 %s209, 1
          %s1695 = smul.addr %s1694, 8
          %s1696 = scalar_lea.vmem [#allocation2], %s1695
          %1698 = dma.done %s1693, 128
        $region64: #{tpu_custom_call.1} parent=59 // pred_fallthru
          _
      $region60: #{tpu_custom_call.1} parent=5 // pred_fallthru
        _
    $region6: #{tpu_custom_call.1} parent=1 // loop_footer
      %s21 = sadd.s32 1, %s17
    $region7: #{tpu_custom_call.1} parent=1 // loop_footer_branch
      %16 = sbr.rel target = $region3
    $region8: #{tpu_custom_call.1} parent=1 // loop_exit
      _
    %1699 = vsyncpa [#allocation3], 1
    %s1700 = scalar_lea.sflag [#allocation3], 1
    %1701 = vsyncpa %s1700, 1

</llo_original>
